<compile_context>
chip_gen: v5e
topology: v5e:2x2
jax: 0.10.0
libtpu: 0.0.40
codegen_flags: <defaults>
</compile_context>

<pallas_src>
import functools

import jax
import jax.numpy as jnp
from jax.experimental import pallas as pl
from jax.experimental.pallas import tpu as pltpu

# ----------------------------- config -----------------------------
BERT_EMBED_SIZE = 32          # H  (real hidden size)
IDIOM2VEC_EMBED_SIZE = 24     # E  (real head output size)
NUM_HEADS = 2
HEAD_DIM = BERT_EMBED_SIZE // NUM_HEADS
INTERMEDIATE = 64             # I
NUM_LAYERS = 2
VOCAB = 100
TYPE_VOCAB = 2
MAX_POS = 64
BATCH = 2                     # N
SEQ = 8                       # M

# lane-dense padded sizes (every last dim padded to 128)
HP = 128                      # padded hidden
IP = 128                      # padded FFN intermediate
OP = 128                      # padded head output
VP = 128                      # padded vocab (one-hot lane width)

MASK_BIAS = -30000.0          # additive bias for padded keys

assert VOCAB <= VP and BERT_EMBED_SIZE <= HP and INTERMEDIATE <= IP
assert IDIOM2VEC_EMBED_SIZE <= OP and TYPE_VOCAB == 2


# ------------------- packed-tensor row layouts (shared by pack/kernel) -------------------
def _vecs_layout(seq, num_layers):
    """Row offsets inside the stacked (K, 128) 'vecs' tensor."""
    r_pos, r_temb = 0, seq
    r_embg, r_embb = seq + 2, seq + 3
    r_bp, r_bh = seq + 4, seq + 5
    r_layer0 = seq + 6                      # 10 rows per layer: bq bk bv bo g1 b1 bi bd g2 b2
    total = r_layer0 + 10 * num_layers
    return r_pos, r_temb, r_embg, r_embb, r_bp, r_bh, r_layer0, total


def _mats_layout(num_layers):
    """Row offsets inside the stacked (R, 128) 'mats' tensor."""
    m_wemb, m_wp, m_wh = 0, VP, VP + HP
    m_layer0 = VP + 2 * HP                  # per layer: wo (HP) | wi (HP) | wd (IP)
    total = m_layer0 + 3 * HP * num_layers
    return m_wemb, m_wp, m_wh, m_layer0, total


# ----------------------------- fused kernel (one grid step = one sequence) -----------------------------
def _fused_bert_idiomifier_kernel(dyn_ref, vecs_ref, mats_ref, wqkv_ref, out_ref,
                                  *, seq, hidden, num_heads, num_layers):
    head_dim = hidden // num_heads
    scale = 1.0 / float(head_dim) ** 0.5
    inv_h = 1.0 / float(hidden)

    r_pos, r_temb, r_embg, r_embb, r_bp, r_bh, r_layer0, _ = _vecs_layout(seq, num_layers)
    m_wemb, m_wp, m_wh, m_layer0, _ = _mats_layout(num_layers)

    # -------- hoisted constants (lane / column-block masks) --------
    lane = jax.lax.broadcasted_iota(jnp.int32, (1, HP), 1)
    col_mask = (lane < hidden).astype(jnp.float32)                  # (1, HP)
    head_masks = [((lane >= h * head_dim) & (lane < (h + 1) * head_dim)).astype(jnp.float32)
                  for h in range(num_heads)]
    ci = jax.lax.broadcasted_iota(jnp.int32, (seq, num_heads * seq), 1)
    blk_masks = [((ci >= h * seq) & (ci < (h + 1) * seq)) for h in range(num_heads)]

    # all small vectors loaded once; padded lanes of gamma/beta/bias are exactly zero
    vecs = vecs_ref[...]
    def vrow(r):
        return vecs[r:r + 1, :]

    def ln(x, g, b, eps=1e-12):
        # padded lanes of x are exactly zero; stats over the real H cols only.
        mu = jnp.sum(x, axis=-1, keepdims=True) * inv_h
        d = (x - mu) * col_mask
        var = jnp.sum(d * d, axis=-1, keepdims=True) * inv_h
        return d * jax.lax.rsqrt(var + eps) * g + b

    # -------- unpack dynamic per-sequence data --------
    d = dyn_ref[0]                                                  # (drows, 128)
    ids = d[0:seq, 0:1].astype(jnp.int32)                           # token ids
    t = d[0:seq, 1:2]                                               # token type (0/1) float
    key_bias = d[seq:seq + 1, 0:num_heads * seq]                    # additive key-padding bias

    # -------- embeddings (word one-hot matmul on MXU + type select + positions) --------
    vocab_iota = jax.lax.broadcasted_iota(jnp.int32, (seq, VP), 1)
    onehot = (ids == vocab_iota).astype(jnp.float32)                # (seq, VP)
    wemb = mats_ref[m_wemb:m_wemb + VP, :]
    emb = jnp.dot(onehot, wemb, preferred_element_type=jnp.float32)
    emb = emb + vrow(r_temb) * (1.0 - t) + vrow(r_temb + 1) * t
    emb = emb + vecs[r_pos:r_pos + seq, :]
    h = ln(emb, vrow(r_embg), vrow(r_embb))

    # -------- encoder layers (static unroll; all weights VMEM-resident) --------
    for li in range(num_layers):
        vb = r_layer0 + li * 10
        mb = m_layer0 + li * 3 * HP

        qkv = jnp.dot(h, wqkv_ref[li], preferred_element_type=jnp.float32)  # (seq, 3*HP)
        q = qkv[:, 0:HP] + vrow(vb + 0)
        k = qkv[:, HP:2 * HP] + vrow(vb + 1)
        v = qkv[:, 2 * HP:3 * HP] + vrow(vb + 2)

        # fused-head attention: one score matmul + one context matmul via lane-masked stacks
        k_stack = jnp.concatenate([k * hm for hm in head_masks], axis=0)    # (NH*seq, HP)
        v_stack = jnp.concatenate([v * hm for hm in head_masks], axis=0)    # (NH*seq, HP)
        s = jax.lax.dot_general(q, k_stack, (((1,), (1,)), ((), ())),
                                preferred_element_type=jnp.float32)         # (seq, NH*seq)
        s = s * scale + key_bias

        # per-head softmax with max-subtract (one exp over the full fused matrix)
        m_blk = jnp.zeros_like(s)
        for bm in blk_masks:
            m_h = jnp.max(jnp.where(bm, s, -1e30), axis=-1, keepdims=True)
            m_blk = m_blk + m_h * bm.astype(jnp.float32)
        p = jnp.exp(s - m_blk)
        inv_blk = jnp.zeros_like(s)
        for bm in blk_masks:
            bmf = bm.astype(jnp.float32)
            d_h = jnp.sum(p * bmf, axis=-1, keepdims=True)
            inv_blk = inv_blk + pl.reciprocal(d_h, approx=True) * bmf
        ctx = jnp.dot(p * inv_blk, v_stack, preferred_element_type=jnp.float32)

        wo = mats_ref[mb:mb + HP, :]
        attn_out = jnp.dot(ctx, wo, preferred_element_type=jnp.float32) + vrow(vb + 3)
        h = ln(h + attn_out, vrow(vb + 4), vrow(vb + 5))

        wi = mats_ref[mb + HP:mb + 2 * HP, :]
        inter = jnp.dot(h, wi, preferred_element_type=jnp.float32) + vrow(vb + 6)
        # TODO(synk): HF default BERT uses exact-erf GELU; tanh-approx used here ("gelu_new").
        inter = jax.nn.gelu(inter, approximate=True)
        wd = mats_ref[mb + 2 * HP:mb + 3 * HP, :]
        dense = jnp.dot(inter, wd, preferred_element_type=jnp.float32) + vrow(vb + 7)
        h = ln(h + dense, vrow(vb + 8), vrow(vb + 9))

    # -------- pooler + idiomifier head on the CLS row only --------
    h_cls = h[0:1, :]
    wp = mats_ref[m_wp:m_wp + HP, :]
    pooled = jnp.tanh(jnp.dot(h_cls, wp, preferred_element_type=jnp.float32) + vrow(r_bp))
    wh = mats_ref[m_wh:m_wh + HP, :]
    y = jnp.dot(pooled, wh, preferred_element_type=jnp.float32) + vrow(r_bh)   # (1, OP)
    out_ref[...] = y[None]                                                      # (1, 1, OP)


# ----------------------------- parameter init -----------------------------
def init_params(key):
    """Synthetic BERT + head, PyTorch layout: Linear W is (out_features, in_features)."""
    def normal(k, shape, scale=0.02):
        return scale * jax.random.normal(k, shape, dtype=jnp.float32)

    keys = jax.random.split(key, 8 + NUM_LAYERS)
    H, I, E = BERT_EMBED_SIZE, INTERMEDIATE, IDIOM2VEC_EMBED_SIZE
    params = {
        "word_emb": normal(keys[0], (VOCAB, H)),
        "pos_emb": normal(keys[1], (MAX_POS, H)),
        "type_emb": normal(keys[2], (TYPE_VOCAB, H)),
        "emb_ln_g": jnp.ones((1, H), jnp.float32),
        "emb_ln_b": jnp.zeros((1, H), jnp.float32),
        "pooler_w": normal(keys[3], (H, H)),
        "pooler_b": jnp.zeros((1, H), jnp.float32),
        "head_w": normal(keys[4], (E, H)),
        "head_b": jnp.zeros((1, E), jnp.float32),
        "layers": [],
    }
    for li in range(NUM_LAYERS):
        lk = jax.random.split(keys[8 + li], 6)
        params["layers"].append(dict(
            wq=normal(lk[0], (H, H)), bq=jnp.zeros((1, H), jnp.float32),
            wk=normal(lk[1], (H, H)), bk=jnp.zeros((1, H), jnp.float32),
            wv=normal(lk[2], (H, H)), bv=jnp.zeros((1, H), jnp.float32),
            wo=normal(lk[3], (H, H)), bo=jnp.zeros((1, H), jnp.float32),
            ln1_g=jnp.ones((1, H), jnp.float32), ln1_b=jnp.zeros((1, H), jnp.float32),
            wi=normal(lk[4], (I, H)), bi=jnp.zeros((1, I), jnp.float32),
            wd=normal(lk[5], (H, I)), bd=jnp.zeros((1, H), jnp.float32),
            ln2_g=jnp.ones((1, H), jnp.float32), ln2_b=jnp.zeros((1, H), jnp.float32),
        ))
    return params


def _pad2(x, rows, cols):
    r, c = x.shape
    return jnp.pad(x, ((0, rows - r), (0, cols - c)))


def pack_params(params, seq):
    """One-time host prep: transpose Linear weights to (in, out), zero-pad every lane
    dim to 128 (gamma/beta padded with ZEROS so padded lanes stay exactly 0), and stack
    everything into 3 tensors (vecs / mats / wqkv) to minimize per-call input DMAs."""
    # mats: all 128-wide weight matrices stacked along rows
    mats_rows = [_pad2(params["word_emb"], VP, HP),
                 _pad2(params["pooler_w"].T, HP, HP),
                 _pad2(params["head_w"].T, HP, OP)]
    for L in params["layers"]:
        mats_rows += [_pad2(L["wo"].T, HP, HP),
                      _pad2(L["wi"].T, HP, IP),
                      _pad2(L["wd"].T, IP, HP)]
    mats = jnp.concatenate(mats_rows, axis=0)

    # wqkv: fused (in, 3*out) per layer, stacked on axis 0
    wqkv = jnp.stack([jnp.concatenate([_pad2(L["wq"].T, HP, HP),
                                       _pad2(L["wk"].T, HP, HP),
                                       _pad2(L["wv"].T, HP, HP)], axis=1)
                      for L in params["layers"]], axis=0)

    # vecs: positions, type emb rows, LN gamma/beta, all biases
    vecs_rows = [_pad2(params["pos_emb"][:seq], seq, HP),
                 _pad2(params["type_emb"], TYPE_VOCAB, HP),
                 _pad2(params["emb_ln_g"], 1, HP),
                 _pad2(params["emb_ln_b"], 1, HP),
                 _pad2(params["pooler_b"], 1, HP),
                 _pad2(params["head_b"], 1, OP)]
    for L in params["layers"]:
        vecs_rows += [_pad2(L["bq"], 1, HP), _pad2(L["bk"], 1, HP), _pad2(L["bv"], 1, HP),
                      _pad2(L["bo"], 1, HP),
                      _pad2(L["ln1_g"], 1, HP), _pad2(L["ln1_b"], 1, HP),
                      _pad2(L["bi"], 1, IP), _pad2(L["bd"], 1, HP),
                      _pad2(L["ln2_g"], 1, HP), _pad2(L["ln2_b"], 1, HP)]
    vecs = jnp.concatenate(vecs_rows, axis=0)
    vecs = jnp.pad(vecs, ((0, (-vecs.shape[0]) % 8), (0, 0)))       # sublane-align rows

    return {"vecs": vecs, "mats": mats, "wqkv": wqkv}


# ----------------------------- forward (single jit: pack-inputs + kernel + slice) -----------------------------
@jax.jit
def bert_idiomifier_forward(packed, x_batch):
    """x_batch: (N, 3, M) int32 -> (N, IDIOM2VEC_EMBED_SIZE) float32."""
    n, three, m = x_batch.shape
    assert three == 3
    drows = ((m + 1 + 7) // 8) * 8                                  # token rows + bias row, sublane-padded

    ids_f = x_batch[:, 0].astype(jnp.float32)                       # (n, m)
    types_f = x_batch[:, 1].astype(jnp.float32)
    mask_f = x_batch[:, 2].astype(jnp.float32)

    # ONE dynamic input per sequence: rows 0..m-1 hold [id, type] in lanes 0/1,
    # row m holds the additive key-padding bias tiled over heads in lanes 0..NH*m-1.
    dyn = jnp.zeros((n, drows, 128), jnp.float32)
    dyn = dyn.at[:, :m, 0].set(ids_f)
    dyn = dyn.at[:, :m, 1].set(types_f)
    key_bias = jnp.where(mask_f > 0.5, 0.0, MASK_BIAS)              # (n, m)
    dyn = dyn.at[:, m, :NUM_HEADS * m].set(jnp.tile(key_bias, (1, NUM_HEADS)))

    kernel = functools.partial(
        _fused_bert_idiomifier_kernel,
        seq=m, hidden=BERT_EMBED_SIZE, num_heads=NUM_HEADS, num_layers=NUM_LAYERS)

    # advisory cost estimate (helps XLA schedule around the custom call)
    per_layer_flops = (2 * m * HP * 3 * HP + 2 * m * HP * (NUM_HEADS * m)
                       + 2 * m * (NUM_HEADS * m) * HP + 2 * m * HP * HP
                       + 2 * m * HP * IP + 2 * m * IP * HP)
    flops = n * (2 * m * VP * HP + NUM_LAYERS * per_layer_flops + 2 * HP * HP + 2 * HP * OP)
    transcendentals = n * (NUM_LAYERS * (m * NUM_HEADS * m + m * IP) + HP + OP)
    bytes_accessed = 4 * (dyn.size + packed["vecs"].size + packed["mats"].size
                          + packed["wqkv"].size + n * OP)

    out = pl.pallas_call(
        kernel,
        out_shape=jax.ShapeDtypeStruct((n, 1, OP), jnp.float32),    # CLS-only, lane-dense
        grid=(n,),
        in_specs=[
            pl.BlockSpec((1, drows, 128), lambda b: (b, 0, 0)),               # per-sequence dynamics
            pl.BlockSpec(packed["vecs"].shape, lambda b: (0, 0)),             # resident params
            pl.BlockSpec(packed["mats"].shape, lambda b: (0, 0)),             # resident weights
            pl.BlockSpec(packed["wqkv"].shape, lambda b: (0, 0, 0)),          # resident fused QKV
        ],
        out_specs=pl.BlockSpec((1, 1, OP), lambda b: (b, 0, 0)),
        compiler_params=pltpu.CompilerParams(dimension_semantics=("parallel",)),
        cost_estimate=pl.CostEstimate(flops=flops, transcendentals=transcendentals,
                                      bytes_accessed=bytes_accessed),
    )(dyn, packed["vecs"], packed["mats"], packed["wqkv"])

    return out.reshape(n, OP)[:, :IDIOM2VEC_EMBED_SIZE]


# ----------------------------- main -----------------------------
if __name__ == "__main__":
    key = jax.random.PRNGKey(0)
    pkey, dkey = jax.random.split(key)
    params = init_params(pkey)
    packed = pack_params(params, SEQ)

    token_ids = jax.random.randint(dkey, (BATCH, SEQ), 0, VOCAB, dtype=jnp.int32)
    token_type_ids = jnp.zeros((BATCH, SEQ), jnp.int32)
    # variable-length attention masks (first sequence uses 6 tokens, second uses 8)
    lengths = jnp.array([6, 8], jnp.int32)
    attention_mask = (jnp.arange(SEQ)[None, :] < lengths[:, None]).astype(jnp.int32)

    x_batch = jnp.stack([token_ids, token_type_ids, attention_mask], axis=1)  # (N, 3, M)

    out = bert_idiomifier_forward(packed, x_batch)
    out = jax.block_until_ready(out)
    assert out.shape == (BATCH, IDIOM2VEC_EMBED_SIZE)
    assert out.dtype == jnp.float32
    assert bool(jnp.all(jnp.isfinite(out)))
    print("KERNEL_OK")
</pallas_src>

<mosaic_0001>
module attributes {stable_mosaic.version = 11 : i64} {
  func.func @_fused_bert_idiomifier_kernel(%arg0: i32, %arg1: memref<1x16x128xf32, #tpu.memory_space<vmem>>, %arg2: memref<40x128xf32, #tpu.memory_space<vmem>>, %arg3: memref<1152x128xf32, #tpu.memory_space<vmem>>, %arg4: memref<2x128x384xf32, #tpu.memory_space<vmem>>, %arg5: memref<1x1x128xf32, #tpu.memory_space<vmem>>) attributes {dimension_semantics = [#tpu.dimension_semantics<parallel>], iteration_bounds = array<i64: 2>, scalar_prefetch = 0 : i64, scratch_operands = 0 : i64, tpu.core_type = #tpu.core_type<tc>, window_params = [{transform_indices = @transform_0, window_bounds = array<i64: 1, 16, 128>}, {pipeline_mode = #tpu.pipeline_mode<synchronous>, transform_indices = @transform_1, window_bounds = array<i64: 40, 128>}, {pipeline_mode = #tpu.pipeline_mode<synchronous>, transform_indices = @transform_2, window_bounds = array<i64: 1152, 128>}, {pipeline_mode = #tpu.pipeline_mode<synchronous>, transform_indices = @transform_3, window_bounds = array<i64: 2, 128, 384>}, {transform_indices = @transform_4, window_bounds = array<i64: 1, 1, 128>}]} {
    %0 = tpu.iota {dimensions = array<i32: 1>} : vector<1x128xi32>
    %c32_i32 = arith.constant 32 : i32
    %1 = vector.broadcast %c32_i32 : i32 to vector<1x128xi32>
    %2 = arith.cmpi slt, %0, %1 : vector<1x128xi32>
    %3 = arith.extui %2 : vector<1x128xi1> to vector<1x128xi32>
    %4 = arith.sitofp %3 : vector<1x128xi32> to vector<1x128xf32>
    %c0_i32 = arith.constant 0 : i32
    %5 = vector.broadcast %c0_i32 : i32 to vector<1x128xi32>
    %6 = arith.cmpi sge, %0, %5 : vector<1x128xi32>
    %c16_i32 = arith.constant 16 : i32
    %7 = vector.broadcast %c16_i32 : i32 to vector<1x128xi32>
    %8 = arith.cmpi slt, %0, %7 : vector<1x128xi32>
    %9 = arith.andi %6, %8 : vector<1x128xi1>
    %10 = arith.extui %9 : vector<1x128xi1> to vector<1x128xi32>
    %11 = arith.sitofp %10 : vector<1x128xi32> to vector<1x128xf32>
    %c16_i32_0 = arith.constant 16 : i32
    %12 = vector.broadcast %c16_i32_0 : i32 to vector<1x128xi32>
    %13 = arith.cmpi sge, %0, %12 : vector<1x128xi32>
    %c32_i32_1 = arith.constant 32 : i32
    %14 = vector.broadcast %c32_i32_1 : i32 to vector<1x128xi32>
    %15 = arith.cmpi slt, %0, %14 : vector<1x128xi32>
    %16 = arith.andi %13, %15 : vector<1x128xi1>
    %17 = arith.extui %16 : vector<1x128xi1> to vector<1x128xi32>
    %18 = arith.sitofp %17 : vector<1x128xi32> to vector<1x128xf32>
    %19 = tpu.iota {dimensions = array<i32: 1>} : vector<8x16xi32>
    %c0_i32_2 = arith.constant 0 : i32
    %20 = vector.broadcast %c0_i32_2 : i32 to vector<8x16xi32>
    %21 = arith.cmpi sge, %19, %20 : vector<8x16xi32>
    %c8_i32 = arith.constant 8 : i32
    %22 = vector.broadcast %c8_i32 : i32 to vector<8x16xi32>
    %23 = arith.cmpi slt, %19, %22 : vector<8x16xi32>
    %24 = arith.andi %21, %23 : vector<8x16xi1>
    %c8_i32_3 = arith.constant 8 : i32
    %25 = vector.broadcast %c8_i32_3 : i32 to vector<8x16xi32>
    %26 = arith.cmpi sge, %19, %25 : vector<8x16xi32>
    %c16_i32_4 = arith.constant 16 : i32
    %27 = vector.broadcast %c16_i32_4 : i32 to vector<8x16xi32>
    %28 = arith.cmpi slt, %19, %27 : vector<8x16xi32>
    %29 = arith.andi %26, %28 : vector<8x16xi1>
    %c0 = arith.constant 0 : index
    %c0_5 = arith.constant 0 : index
    %30 = vector.load %arg2[%c0, %c0_5] : memref<40x128xf32, #tpu.memory_space<vmem>>, vector<40x128xf32>
    %c0_6 = arith.constant 0 : index
    %c0_7 = arith.constant 0 : index
    %c0_8 = arith.constant 0 : index
    %31 = vector.load %arg1[%c0_6, %c0_7, %c0_8] : memref<1x16x128xf32, #tpu.memory_space<vmem>>, vector<1x16x128xf32>
    %32 = vector.shape_cast %31 : vector<1x16x128xf32> to vector<16x128xf32>
    %33 = vector.extract_strided_slice %32 {offsets = [0, 0], sizes = [8, 1], strides = [1, 1]} : vector<16x128xf32> to vector<8x1xf32>
    %34 = arith.fptosi %33 : vector<8x1xf32> to vector<8x1xi32>
    %35 = vector.extract_strided_slice %32 {offsets = [0, 1], sizes = [8, 1], strides = [1, 1]} : vector<16x128xf32> to vector<8x1xf32>
    %36 = vector.extract_strided_slice %32 {offsets = [8, 0], sizes = [1, 16], strides = [1, 1]} : vector<16x128xf32> to vector<1x16xf32>
    %37 = tpu.iota {dimensions = array<i32: 1>} : vector<8x128xi32>
    %38 = vector.broadcast %34 : vector<8x1xi32> to vector<8x128xi32>
    %39 = arith.cmpi eq, %38, %37 : vector<8x128xi32>
    %40 = arith.extui %39 : vector<8x128xi1> to vector<8x128xi32>
    %41 = arith.sitofp %40 : vector<8x128xi32> to vector<8x128xf32>
    %c0_9 = arith.constant 0 : index
    %c0_10 = arith.constant 0 : index
    %42 = vector.load %arg3[%c0_9, %c0_10] : memref<1152x128xf32, #tpu.memory_space<vmem>>, vector<128x128xf32>
    %cst = arith.constant dense<0.000000e+00> : vector<8x128xf32>
    %43 = tpu.matmul %41, %42, %cst {dimension_numbers = #tpu.dot_dimension_numbers<[1], [0], [0], [1], [0, 0, 1, 1], [], []>} : vector<8x128xf32>, vector<128x128xf32>, vector<8x128xf32> -> vector<8x128xf32>
    %44 = vector.extract_strided_slice %30 {offsets = [8, 0], sizes = [1, 128], strides = [1, 1]} : vector<40x128xf32> to vector<1x128xf32>
    %cst_11 = arith.constant 1.000000e+00 : f32
    %45 = vector.broadcast %cst_11 : f32 to vector<8x1xf32>
    %46 = arith.subf %45, %35 : vector<8x1xf32>
    %47 = vector.broadcast %44 : vector<1x128xf32> to vector<8x128xf32>
    %48 = vector.broadcast %46 : vector<8x1xf32> to vector<8x128xf32>
    %49 = arith.mulf %47, %48 : vector<8x128xf32>
    %50 = arith.addf %43, %49 : vector<8x128xf32>
    %51 = vector.extract_strided_slice %30 {offsets = [9, 0], sizes = [1, 128], strides = [1, 1]} : vector<40x128xf32> to vector<1x128xf32>
    %52 = vector.broadcast %51 : vector<1x128xf32> to vector<8x128xf32>
    %53 = vector.broadcast %35 : vector<8x1xf32> to vector<8x128xf32>
    %54 = arith.mulf %52, %53 : vector<8x128xf32>
    %55 = arith.addf %50, %54 : vector<8x128xf32>
    %56 = vector.extract_strided_slice %30 {offsets = [0, 0], sizes = [8, 128], strides = [1, 1]} : vector<40x128xf32> to vector<8x128xf32>
    %57 = arith.addf %55, %56 : vector<8x128xf32>
    %58 = vector.extract_strided_slice %30 {offsets = [10, 0], sizes = [1, 128], strides = [1, 1]} : vector<40x128xf32> to vector<1x128xf32>
    %59 = vector.extract_strided_slice %30 {offsets = [11, 0], sizes = [1, 128], strides = [1, 1]} : vector<40x128xf32> to vector<1x128xf32>
    %cst_12 = arith.constant dense<0.000000e+00> : vector<8xf32>
    %60 = vector.multi_reduction <add>, %57, %cst_12 [1] : vector<8x128xf32> to vector<8xf32>
    %61 = vector.shape_cast %60 : vector<8xf32> to vector<8x1xf32>
    %cst_13 = arith.constant 3.125000e-02 : f32
    %62 = vector.broadcast %cst_13 : f32 to vector<8x1xf32>
    %63 = arith.mulf %61, %62 : vector<8x1xf32>
    %64 = vector.broadcast %63 : vector<8x1xf32> to vector<8x128xf32>
    %65 = arith.subf %57, %64 : vector<8x128xf32>
    %66 = vector.broadcast %4 : vector<1x128xf32> to vector<8x128xf32>
    %67 = arith.mulf %65, %66 : vector<8x128xf32>
    %68 = arith.mulf %67, %67 : vector<8x128xf32>
    %cst_14 = arith.constant dense<0.000000e+00> : vector<8xf32>
    %69 = vector.multi_reduction <add>, %68, %cst_14 [1] : vector<8x128xf32> to vector<8xf32>
    %70 = vector.shape_cast %69 : vector<8xf32> to vector<8x1xf32>
    %cst_15 = arith.constant 3.125000e-02 : f32
    %71 = vector.broadcast %cst_15 : f32 to vector<8x1xf32>
    %72 = arith.mulf %70, %71 : vector<8x1xf32>
    %cst_16 = arith.constant 9.99999996E-13 : f32
    %73 = vector.broadcast %cst_16 : f32 to vector<8x1xf32>
    %74 = arith.addf %72, %73 : vector<8x1xf32>
    %75 = math.rsqrt %74 : vector<8x1xf32>
    %76 = vector.broadcast %75 : vector<8x1xf32> to vector<8x128xf32>
    %77 = arith.mulf %67, %76 : vector<8x128xf32>
    %78 = vector.broadcast %58 : vector<1x128xf32> to vector<8x128xf32>
    %79 = arith.mulf %77, %78 : vector<8x128xf32>
    %80 = vector.broadcast %59 : vector<1x128xf32> to vector<8x128xf32>
    %81 = arith.addf %79, %80 : vector<8x128xf32>
    %c0_17 = arith.constant 0 : index
    %c0_18 = arith.constant 0 : index
    %c0_19 = arith.constant 0 : index
    %82 = vector.load %arg4[%c0_17, %c0_18, %c0_19] : memref<2x128x384xf32, #tpu.memory_space<vmem>>, vector<1x128x384xf32>
    %83 = vector.shape_cast %82 : vector<1x128x384xf32> to vector<128x384xf32>
    %cst_20 = arith.constant dense<0.000000e+00> : vector<8x384xf32>
    %84 = tpu.matmul %81, %83, %cst_20 {dimension_numbers = #tpu.dot_dimension_numbers<[1], [0], [0], [1], [0, 0, 1, 1], [], []>} : vector<8x128xf32>, vector<128x384xf32>, vector<8x384xf32> -> vector<8x384xf32>
    %85 = vector.extract_strided_slice %84 {offsets = [0, 0], sizes = [8, 128], strides = [1, 1]} : vector<8x384xf32> to vector<8x128xf32>
    %86 = vector.extract_strided_slice %30 {offsets = [14, 0], sizes = [1, 128], strides = [1, 1]} : vector<40x128xf32> to vector<1x128xf32>
    %87 = vector.broadcast %86 : vector<1x128xf32> to vector<8x128xf32>
    %88 = arith.addf %85, %87 : vector<8x128xf32>
    %89 = vector.extract_strided_slice %84 {offsets = [0, 128], sizes = [8, 128], strides = [1, 1]} : vector<8x384xf32> to vector<8x128xf32>
    %90 = vector.extract_strided_slice %30 {offsets = [15, 0], sizes = [1, 128], strides = [1, 1]} : vector<40x128xf32> to vector<1x128xf32>
    %91 = vector.broadcast %90 : vector<1x128xf32> to vector<8x128xf32>
    %92 = arith.addf %89, %91 : vector<8x128xf32>
    %93 = vector.extract_strided_slice %84 {offsets = [0, 256], sizes = [8, 128], strides = [1, 1]} : vector<8x384xf32> to vector<8x128xf32>
    %94 = vector.extract_strided_slice %30 {offsets = [16, 0], sizes = [1, 128], strides = [1, 1]} : vector<40x128xf32> to vector<1x128xf32>
    %95 = vector.broadcast %94 : vector<1x128xf32> to vector<8x128xf32>
    %96 = arith.addf %93, %95 : vector<8x128xf32>
    %97 = vector.broadcast %11 : vector<1x128xf32> to vector<8x128xf32>
    %98 = arith.mulf %92, %97 : vector<8x128xf32>
    %99 = vector.broadcast %18 : vector<1x128xf32> to vector<8x128xf32>
    %100 = arith.mulf %92, %99 : vector<8x128xf32>
    %101 = tpu.concatenate %98, %100 in 0 : vector<8x128xf32>, vector<8x128xf32> -> vector<16x128xf32>
    %102 = vector.broadcast %11 : vector<1x128xf32> to vector<8x128xf32>
    %103 = arith.mulf %96, %102 : vector<8x128xf32>
    %104 = vector.broadcast %18 : vector<1x128xf32> to vector<8x128xf32>
    %105 = arith.mulf %96, %104 : vector<8x128xf32>
    %106 = tpu.concatenate %103, %105 in 0 : vector<8x128xf32>, vector<8x128xf32> -> vector<16x128xf32>
    %cst_21 = arith.constant dense<0.000000e+00> : vector<8x16xf32>
    %107 = tpu.matmul %88, %101, %cst_21 {dimension_numbers = #tpu.dot_dimension_numbers<[1], [1], [0], [0], [0, 0, 1, 0], [], []>} : vector<8x128xf32>, vector<16x128xf32>, vector<8x16xf32> -> vector<8x16xf32>
    %cst_22 = arith.constant 2.500000e-01 : f32
    %108 = vector.broadcast %cst_22 : f32 to vector<8x16xf32>
    %109 = arith.mulf %107, %108 : vector<8x16xf32>
    %110 = vector.broadcast %36 : vector<1x16xf32> to vector<8x16xf32>
    %111 = arith.addf %109, %110 : vector<8x16xf32>
    %cst_23 = arith.constant 0.000000e+00 : f32
    %112 = vector.broadcast %cst_23 : f32 to vector<8x16xf32>
    %cst_24 = arith.constant -1.000000e+30 : f32
    %113 = vector.broadcast %cst_24 : f32 to vector<8x16xf32>
    %114 = arith.select %24, %111, %113 : vector<8x16xi1>, vector<8x16xf32>
    %cst_25 = arith.constant dense<0xFF800000> : vector<8xf32>
    %115 = vector.multi_reduction <maximumf>, %114, %cst_25 [1] : vector<8x16xf32> to vector<8xf32>
    %116 = vector.shape_cast %115 : vector<8xf32> to vector<8x1xf32>
    %117 = arith.extui %24 : vector<8x16xi1> to vector<8x16xi32>
    %118 = arith.sitofp %117 : vector<8x16xi32> to vector<8x16xf32>
    %119 = vector.broadcast %116 : vector<8x1xf32> to vector<8x16xf32>
    %120 = arith.mulf %119, %118 : vector<8x16xf32>
    %121 = arith.addf %112, %120 : vector<8x16xf32>
    %cst_26 = arith.constant -1.000000e+30 : f32
    %122 = vector.broadcast %cst_26 : f32 to vector<8x16xf32>
    %123 = arith.select %29, %111, %122 : vector<8x16xi1>, vector<8x16xf32>
    %cst_27 = arith.constant dense<0xFF800000> : vector<8xf32>
    %124 = vector.multi_reduction <maximumf>, %123, %cst_27 [1] : vector<8x16xf32> to vector<8xf32>
    %125 = vector.shape_cast %124 : vector<8xf32> to vector<8x1xf32>
    %126 = arith.extui %29 : vector<8x16xi1> to vector<8x16xi32>
    %127 = arith.sitofp %126 : vector<8x16xi32> to vector<8x16xf32>
    %128 = vector.broadcast %125 : vector<8x1xf32> to vector<8x16xf32>
    %129 = arith.mulf %128, %127 : vector<8x16xf32>
    %130 = arith.addf %121, %129 : vector<8x16xf32>
    %131 = arith.subf %111, %130 : vector<8x16xf32>
    %132 = math.exp %131 : vector<8x16xf32>
    %cst_28 = arith.constant 0.000000e+00 : f32
    %133 = vector.broadcast %cst_28 : f32 to vector<8x16xf32>
    %134 = arith.extui %24 : vector<8x16xi1> to vector<8x16xi32>
    %135 = arith.sitofp %134 : vector<8x16xi32> to vector<8x16xf32>
    %136 = arith.mulf %132, %135 : vector<8x16xf32>
    %cst_29 = arith.constant dense<0.000000e+00> : vector<8xf32>
    %137 = vector.multi_reduction <add>, %136, %cst_29 [1] : vector<8x16xf32> to vector<8xf32>
    %138 = vector.shape_cast %137 : vector<8xf32> to vector<8x1xf32>
    %139 = tpu.reciprocal %138 {approx = true} : vector<8x1xf32> -> vector<8x1xf32>
    %140 = vector.broadcast %139 : vector<8x1xf32> to vector<8x16xf32>
    %141 = arith.mulf %140, %135 : vector<8x16xf32>
    %142 = arith.addf %133, %141 : vector<8x16xf32>
    %143 = arith.extui %29 : vector<8x16xi1> to vector<8x16xi32>
    %144 = arith.sitofp %143 : vector<8x16xi32> to vector<8x16xf32>
    %145 = arith.mulf %132, %144 : vector<8x16xf32>
    %cst_30 = arith.constant dense<0.000000e+00> : vector<8xf32>
    %146 = vector.multi_reduction <add>, %145, %cst_30 [1] : vector<8x16xf32> to vector<8xf32>
    %147 = vector.shape_cast %146 : vector<8xf32> to vector<8x1xf32>
    %148 = tpu.reciprocal %147 {approx = true} : vector<8x1xf32> -> vector<8x1xf32>
    %149 = vector.broadcast %148 : vector<8x1xf32> to vector<8x16xf32>
    %150 = arith.mulf %149, %144 : vector<8x16xf32>
    %151 = arith.addf %142, %150 : vector<8x16xf32>
    %152 = arith.mulf %132, %151 : vector<8x16xf32>
    %cst_31 = arith.constant dense<0.000000e+00> : vector<8x128xf32>
    %153 = tpu.matmul %152, %106, %cst_31 {dimension_numbers = #tpu.dot_dimension_numbers<[1], [0], [0], [1], [0, 0, 1, 1], [], []>} : vector<8x16xf32>, vector<16x128xf32>, vector<8x128xf32> -> vector<8x128xf32>
    %c384 = arith.constant 384 : index
    %c0_32 = arith.constant 0 : index
    %154 = vector.load %arg3[%c384, %c0_32] : memref<1152x128xf32, #tpu.memory_space<vmem>>, vector<128x128xf32>
    %cst_33 = arith.constant dense<0.000000e+00> : vector<8x128xf32>
    %155 = tpu.matmul %153, %154, %cst_33 {dimension_numbers = #tpu.dot_dimension_numbers<[1], [0], [0], [1], [0, 0, 1, 1], [], []>} : vector<8x128xf32>, vector<128x128xf32>, vector<8x128xf32> -> vector<8x128xf32>
    %156 = vector.extract_strided_slice %30 {offsets = [17, 0], sizes = [1, 128], strides = [1, 1]} : vector<40x128xf32> to vector<1x128xf32>
    %157 = vector.broadcast %156 : vector<1x128xf32> to vector<8x128xf32>
    %158 = arith.addf %155, %157 : vector<8x128xf32>
    %159 = arith.addf %81, %158 : vector<8x128xf32>
    %160 = vector.extract_strided_slice %30 {offsets = [18, 0], sizes = [1, 128], strides = [1, 1]} : vector<40x128xf32> to vector<1x128xf32>
    %161 = vector.extract_strided_slice %30 {offsets = [19, 0], sizes = [1, 128], strides = [1, 1]} : vector<40x128xf32> to vector<1x128xf32>
    %cst_34 = arith.constant dense<0.000000e+00> : vector<8xf32>
    %162 = vector.multi_reduction <add>, %159, %cst_34 [1] : vector<8x128xf32> to vector<8xf32>
    %163 = vector.shape_cast %162 : vector<8xf32> to vector<8x1xf32>
    %cst_35 = arith.constant 3.125000e-02 : f32
    %164 = vector.broadcast %cst_35 : f32 to vector<8x1xf32>
    %165 = arith.mulf %163, %164 : vector<8x1xf32>
    %166 = vector.broadcast %165 : vector<8x1xf32> to vector<8x128xf32>
    %167 = arith.subf %159, %166 : vector<8x128xf32>
    %168 = vector.broadcast %4 : vector<1x128xf32> to vector<8x128xf32>
    %169 = arith.mulf %167, %168 : vector<8x128xf32>
    %170 = arith.mulf %169, %169 : vector<8x128xf32>
    %cst_36 = arith.constant dense<0.000000e+00> : vector<8xf32>
    %171 = vector.multi_reduction <add>, %170, %cst_36 [1] : vector<8x128xf32> to vector<8xf32>
    %172 = vector.shape_cast %171 : vector<8xf32> to vector<8x1xf32>
    %cst_37 = arith.constant 3.125000e-02 : f32
    %173 = vector.broadcast %cst_37 : f32 to vector<8x1xf32>
    %174 = arith.mulf %172, %173 : vector<8x1xf32>
    %cst_38 = arith.constant 9.99999996E-13 : f32
    %175 = vector.broadcast %cst_38 : f32 to vector<8x1xf32>
    %176 = arith.addf %174, %175 : vector<8x1xf32>
    %177 = math.rsqrt %176 : vector<8x1xf32>
    %178 = vector.broadcast %177 : vector<8x1xf32> to vector<8x128xf32>
    %179 = arith.mulf %169, %178 : vector<8x128xf32>
    %180 = vector.broadcast %160 : vector<1x128xf32> to vector<8x128xf32>
    %181 = arith.mulf %179, %180 : vector<8x128xf32>
    %182 = vector.broadcast %161 : vector<1x128xf32> to vector<8x128xf32>
    %183 = arith.addf %181, %182 : vector<8x128xf32>
    %c512 = arith.constant 512 : index
    %c0_39 = arith.constant 0 : index
    %184 = vector.load %arg3[%c512, %c0_39] : memref<1152x128xf32, #tpu.memory_space<vmem>>, vector<128x128xf32>
    %cst_40 = arith.constant dense<0.000000e+00> : vector<8x128xf32>
    %185 = tpu.matmul %183, %184, %cst_40 {dimension_numbers = #tpu.dot_dimension_numbers<[1], [0], [0], [1], [0, 0, 1, 1], [], []>} : vector<8x128xf32>, vector<128x128xf32>, vector<8x128xf32> -> vector<8x128xf32>
    %186 = vector.extract_strided_slice %30 {offsets = [20, 0], sizes = [1, 128], strides = [1, 1]} : vector<40x128xf32> to vector<1x128xf32>
    %187 = vector.broadcast %186 : vector<1x128xf32> to vector<8x128xf32>
    %188 = arith.addf %185, %187 : vector<8x128xf32>
    %189 = arith.mulf %188, %188 : vector<8x128xf32>
    %190 = arith.mulf %188, %189 : vector<8x128xf32>
    %cst_41 = arith.constant 4.471500e-02 : f32
    %191 = vector.broadcast %cst_41 : f32 to vector<8x128xf32>
    %192 = arith.mulf %191, %190 : vector<8x128xf32>
    %193 = arith.addf %188, %192 : vector<8x128xf32>
    %cst_42 = arith.constant 0.797884583 : f32
    %194 = vector.broadcast %cst_42 : f32 to vector<8x128xf32>
    %195 = arith.mulf %194, %193 : vector<8x128xf32>
    %196 = math.tanh %195 : vector<8x128xf32>
    %cst_43 = arith.constant 1.000000e+00 : f32
    %197 = vector.broadcast %cst_43 : f32 to vector<8x128xf32>
    %198 = arith.addf %197, %196 : vector<8x128xf32>
    %cst_44 = arith.constant 5.000000e-01 : f32
    %199 = vector.broadcast %cst_44 : f32 to vector<8x128xf32>
    %200 = arith.mulf %199, %198 : vector<8x128xf32>
    %201 = arith.mulf %188, %200 : vector<8x128xf32>
    %c640 = arith.constant 640 : index
    %c0_45 = arith.constant 0 : index
    %202 = vector.load %arg3[%c640, %c0_45] : memref<1152x128xf32, #tpu.memory_space<vmem>>, vector<128x128xf32>
    %cst_46 = arith.constant dense<0.000000e+00> : vector<8x128xf32>
    %203 = tpu.matmul %201, %202, %cst_46 {dimension_numbers = #tpu.dot_dimension_numbers<[1], [0], [0], [1], [0, 0, 1, 1], [], []>} : vector<8x128xf32>, vector<128x128xf32>, vector<8x128xf32> -> vector<8x128xf32>
    %204 = vector.extract_strided_slice %30 {offsets = [21, 0], sizes = [1, 128], strides = [1, 1]} : vector<40x128xf32> to vector<1x128xf32>
    %205 = vector.broadcast %204 : vector<1x128xf32> to vector<8x128xf32>
    %206 = arith.addf %203, %205 : vector<8x128xf32>
    %207 = arith.addf %183, %206 : vector<8x128xf32>
    %208 = vector.extract_strided_slice %30 {offsets = [22, 0], sizes = [1, 128], strides = [1, 1]} : vector<40x128xf32> to vector<1x128xf32>
    %209 = vector.extract_strided_slice %30 {offsets = [23, 0], sizes = [1, 128], strides = [1, 1]} : vector<40x128xf32> to vector<1x128xf32>
    %cst_47 = arith.constant dense<0.000000e+00> : vector<8xf32>
    %210 = vector.multi_reduction <add>, %207, %cst_47 [1] : vector<8x128xf32> to vector<8xf32>
    %211 = vector.shape_cast %210 : vector<8xf32> to vector<8x1xf32>
    %cst_48 = arith.constant 3.125000e-02 : f32
    %212 = vector.broadcast %cst_48 : f32 to vector<8x1xf32>
    %213 = arith.mulf %211, %212 : vector<8x1xf32>
    %214 = vector.broadcast %213 : vector<8x1xf32> to vector<8x128xf32>
    %215 = arith.subf %207, %214 : vector<8x128xf32>
    %216 = vector.broadcast %4 : vector<1x128xf32> to vector<8x128xf32>
    %217 = arith.mulf %215, %216 : vector<8x128xf32>
    %218 = arith.mulf %217, %217 : vector<8x128xf32>
    %cst_49 = arith.constant dense<0.000000e+00> : vector<8xf32>
    %219 = vector.multi_reduction <add>, %218, %cst_49 [1] : vector<8x128xf32> to vector<8xf32>
    %220 = vector.shape_cast %219 : vector<8xf32> to vector<8x1xf32>
    %cst_50 = arith.constant 3.125000e-02 : f32
    %221 = vector.broadcast %cst_50 : f32 to vector<8x1xf32>
    %222 = arith.mulf %220, %221 : vector<8x1xf32>
    %cst_51 = arith.constant 9.99999996E-13 : f32
    %223 = vector.broadcast %cst_51 : f32 to vector<8x1xf32>
    %224 = arith.addf %222, %223 : vector<8x1xf32>
    %225 = math.rsqrt %224 : vector<8x1xf32>
    %226 = vector.broadcast %225 : vector<8x1xf32> to vector<8x128xf32>
    %227 = arith.mulf %217, %226 : vector<8x128xf32>
    %228 = vector.broadcast %208 : vector<1x128xf32> to vector<8x128xf32>
    %229 = arith.mulf %227, %228 : vector<8x128xf32>
    %230 = vector.broadcast %209 : vector<1x128xf32> to vector<8x128xf32>
    %231 = arith.addf %229, %230 : vector<8x128xf32>
    %c1 = arith.constant 1 : index
    %c0_52 = arith.constant 0 : index
    %c0_53 = arith.constant 0 : index
    %232 = vector.load %arg4[%c1, %c0_52, %c0_53] : memref<2x128x384xf32, #tpu.memory_space<vmem>>, vector<1x128x384xf32>
    %233 = vector.shape_cast %232 : vector<1x128x384xf32> to vector<128x384xf32>
    %cst_54 = arith.constant dense<0.000000e+00> : vector<8x384xf32>
    %234 = tpu.matmul %231, %233, %cst_54 {dimension_numbers = #tpu.dot_dimension_numbers<[1], [0], [0], [1], [0, 0, 1, 1], [], []>} : vector<8x128xf32>, vector<128x384xf32>, vector<8x384xf32> -> vector<8x384xf32>
    %235 = vector.extract_strided_slice %234 {offsets = [0, 0], sizes = [8, 128], strides = [1, 1]} : vector<8x384xf32> to vector<8x128xf32>
    %236 = vector.extract_strided_slice %30 {offsets = [24, 0], sizes = [1, 128], strides = [1, 1]} : vector<40x128xf32> to vector<1x128xf32>
    %237 = vector.broadcast %236 : vector<1x128xf32> to vector<8x128xf32>
    %238 = arith.addf %235, %237 : vector<8x128xf32>
    %239 = vector.extract_strided_slice %234 {offsets = [0, 128], sizes = [8, 128], strides = [1, 1]} : vector<8x384xf32> to vector<8x128xf32>
    %240 = vector.extract_strided_slice %30 {offsets = [25, 0], sizes = [1, 128], strides = [1, 1]} : vector<40x128xf32> to vector<1x128xf32>
    %241 = vector.broadcast %240 : vector<1x128xf32> to vector<8x128xf32>
    %242 = arith.addf %239, %241 : vector<8x128xf32>
    %243 = vector.extract_strided_slice %234 {offsets = [0, 256], sizes = [8, 128], strides = [1, 1]} : vector<8x384xf32> to vector<8x128xf32>
    %244 = vector.extract_strided_slice %30 {offsets = [26, 0], sizes = [1, 128], strides = [1, 1]} : vector<40x128xf32> to vector<1x128xf32>
    %245 = vector.broadcast %244 : vector<1x128xf32> to vector<8x128xf32>
    %246 = arith.addf %243, %245 : vector<8x128xf32>
    %247 = vector.broadcast %11 : vector<1x128xf32> to vector<8x128xf32>
    %248 = arith.mulf %242, %247 : vector<8x128xf32>
    %249 = vector.broadcast %18 : vector<1x128xf32> to vector<8x128xf32>
    %250 = arith.mulf %242, %249 : vector<8x128xf32>
    %251 = tpu.concatenate %248, %250 in 0 : vector<8x128xf32>, vector<8x128xf32> -> vector<16x128xf32>
    %252 = vector.broadcast %11 : vector<1x128xf32> to vector<8x128xf32>
    %253 = arith.mulf %246, %252 : vector<8x128xf32>
    %254 = vector.broadcast %18 : vector<1x128xf32> to vector<8x128xf32>
    %255 = arith.mulf %246, %254 : vector<8x128xf32>
    %256 = tpu.concatenate %253, %255 in 0 : vector<8x128xf32>, vector<8x128xf32> -> vector<16x128xf32>
    %cst_55 = arith.constant dense<0.000000e+00> : vector<8x16xf32>
    %257 = tpu.matmul %238, %251, %cst_55 {dimension_numbers = #tpu.dot_dimension_numbers<[1], [1], [0], [0], [0, 0, 1, 0], [], []>} : vector<8x128xf32>, vector<16x128xf32>, vector<8x16xf32> -> vector<8x16xf32>
    %cst_56 = arith.constant 2.500000e-01 : f32
    %258 = vector.broadcast %cst_56 : f32 to vector<8x16xf32>
    %259 = arith.mulf %257, %258 : vector<8x16xf32>
    %260 = vector.broadcast %36 : vector<1x16xf32> to vector<8x16xf32>
    %261 = arith.addf %259, %260 : vector<8x16xf32>
    %cst_57 = arith.constant 0.000000e+00 : f32
    %262 = vector.broadcast %cst_57 : f32 to vector<8x16xf32>
    %cst_58 = arith.constant -1.000000e+30 : f32
    %263 = vector.broadcast %cst_58 : f32 to vector<8x16xf32>
    %264 = arith.select %24, %261, %263 : vector<8x16xi1>, vector<8x16xf32>
    %cst_59 = arith.constant dense<0xFF800000> : vector<8xf32>
    %265 = vector.multi_reduction <maximumf>, %264, %cst_59 [1] : vector<8x16xf32> to vector<8xf32>
    %266 = vector.shape_cast %265 : vector<8xf32> to vector<8x1xf32>
    %267 = arith.extui %24 : vector<8x16xi1> to vector<8x16xi32>
    %268 = arith.sitofp %267 : vector<8x16xi32> to vector<8x16xf32>
    %269 = vector.broadcast %266 : vector<8x1xf32> to vector<8x16xf32>
    %270 = arith.mulf %269, %268 : vector<8x16xf32>
    %271 = arith.addf %262, %270 : vector<8x16xf32>
    %cst_60 = arith.constant -1.000000e+30 : f32
    %272 = vector.broadcast %cst_60 : f32 to vector<8x16xf32>
    %273 = arith.select %29, %261, %272 : vector<8x16xi1>, vector<8x16xf32>
    %cst_61 = arith.constant dense<0xFF800000> : vector<8xf32>
    %274 = vector.multi_reduction <maximumf>, %273, %cst_61 [1] : vector<8x16xf32> to vector<8xf32>
    %275 = vector.shape_cast %274 : vector<8xf32> to vector<8x1xf32>
    %276 = arith.extui %29 : vector<8x16xi1> to vector<8x16xi32>
    %277 = arith.sitofp %276 : vector<8x16xi32> to vector<8x16xf32>
    %278 = vector.broadcast %275 : vector<8x1xf32> to vector<8x16xf32>
    %279 = arith.mulf %278, %277 : vector<8x16xf32>
    %280 = arith.addf %271, %279 : vector<8x16xf32>
    %281 = arith.subf %261, %280 : vector<8x16xf32>
    %282 = math.exp %281 : vector<8x16xf32>
    %cst_62 = arith.constant 0.000000e+00 : f32
    %283 = vector.broadcast %cst_62 : f32 to vector<8x16xf32>
    %284 = arith.extui %24 : vector<8x16xi1> to vector<8x16xi32>
    %285 = arith.sitofp %284 : vector<8x16xi32> to vector<8x16xf32>
    %286 = arith.mulf %282, %285 : vector<8x16xf32>
    %cst_63 = arith.constant dense<0.000000e+00> : vector<8xf32>
    %287 = vector.multi_reduction <add>, %286, %cst_63 [1] : vector<8x16xf32> to vector<8xf32>
    %288 = vector.shape_cast %287 : vector<8xf32> to vector<8x1xf32>
    %289 = tpu.reciprocal %288 {approx = true} : vector<8x1xf32> -> vector<8x1xf32>
    %290 = vector.broadcast %289 : vector<8x1xf32> to vector<8x16xf32>
    %291 = arith.mulf %290, %285 : vector<8x16xf32>
    %292 = arith.addf %283, %291 : vector<8x16xf32>
    %293 = arith.extui %29 : vector<8x16xi1> to vector<8x16xi32>
    %294 = arith.sitofp %293 : vector<8x16xi32> to vector<8x16xf32>
    %295 = arith.mulf %282, %294 : vector<8x16xf32>
    %cst_64 = arith.constant dense<0.000000e+00> : vector<8xf32>
    %296 = vector.multi_reduction <add>, %295, %cst_64 [1] : vector<8x16xf32> to vector<8xf32>
    %297 = vector.shape_cast %296 : vector<8xf32> to vector<8x1xf32>
    %298 = tpu.reciprocal %297 {approx = true} : vector<8x1xf32> -> vector<8x1xf32>
    %299 = vector.broadcast %298 : vector<8x1xf32> to vector<8x16xf32>
    %300 = arith.mulf %299, %294 : vector<8x16xf32>
    %301 = arith.addf %292, %300 : vector<8x16xf32>
    %302 = arith.mulf %282, %301 : vector<8x16xf32>
    %cst_65 = arith.constant dense<0.000000e+00> : vector<8x128xf32>
    %303 = tpu.matmul %302, %256, %cst_65 {dimension_numbers = #tpu.dot_dimension_numbers<[1], [0], [0], [1], [0, 0, 1, 1], [], []>} : vector<8x16xf32>, vector<16x128xf32>, vector<8x128xf32> -> vector<8x128xf32>
    %c768 = arith.constant 768 : index
    %c0_66 = arith.constant 0 : index
    %304 = vector.load %arg3[%c768, %c0_66] : memref<1152x128xf32, #tpu.memory_space<vmem>>, vector<128x128xf32>
    %cst_67 = arith.constant dense<0.000000e+00> : vector<8x128xf32>
    %305 = tpu.matmul %303, %304, %cst_67 {dimension_numbers = #tpu.dot_dimension_numbers<[1], [0], [0], [1], [0, 0, 1, 1], [], []>} : vector<8x128xf32>, vector<128x128xf32>, vector<8x128xf32> -> vector<8x128xf32>
    %306 = vector.extract_strided_slice %30 {offsets = [27, 0], sizes = [1, 128], strides = [1, 1]} : vector<40x128xf32> to vector<1x128xf32>
    %307 = vector.broadcast %306 : vector<1x128xf32> to vector<8x128xf32>
    %308 = arith.addf %305, %307 : vector<8x128xf32>
    %309 = arith.addf %231, %308 : vector<8x128xf32>
    %310 = vector.extract_strided_slice %30 {offsets = [28, 0], sizes = [1, 128], strides = [1, 1]} : vector<40x128xf32> to vector<1x128xf32>
    %311 = vector.extract_strided_slice %30 {offsets = [29, 0], sizes = [1, 128], strides = [1, 1]} : vector<40x128xf32> to vector<1x128xf32>
    %cst_68 = arith.constant dense<0.000000e+00> : vector<8xf32>
    %312 = vector.multi_reduction <add>, %309, %cst_68 [1] : vector<8x128xf32> to vector<8xf32>
    %313 = vector.shape_cast %312 : vector<8xf32> to vector<8x1xf32>
    %cst_69 = arith.constant 3.125000e-02 : f32
    %314 = vector.broadcast %cst_69 : f32 to vector<8x1xf32>
    %315 = arith.mulf %313, %314 : vector<8x1xf32>
    %316 = vector.broadcast %315 : vector<8x1xf32> to vector<8x128xf32>
    %317 = arith.subf %309, %316 : vector<8x128xf32>
    %318 = vector.broadcast %4 : vector<1x128xf32> to vector<8x128xf32>
    %319 = arith.mulf %317, %318 : vector<8x128xf32>
    %320 = arith.mulf %319, %319 : vector<8x128xf32>
    %cst_70 = arith.constant dense<0.000000e+00> : vector<8xf32>
    %321 = vector.multi_reduction <add>, %320, %cst_70 [1] : vector<8x128xf32> to vector<8xf32>
    %322 = vector.shape_cast %321 : vector<8xf32> to vector<8x1xf32>
    %cst_71 = arith.constant 3.125000e-02 : f32
    %323 = vector.broadcast %cst_71 : f32 to vector<8x1xf32>
    %324 = arith.mulf %322, %323 : vector<8x1xf32>
    %cst_72 = arith.constant 9.99999996E-13 : f32
    %325 = vector.broadcast %cst_72 : f32 to vector<8x1xf32>
    %326 = arith.addf %324, %325 : vector<8x1xf32>
    %327 = math.rsqrt %326 : vector<8x1xf32>
    %328 = vector.broadcast %327 : vector<8x1xf32> to vector<8x128xf32>
    %329 = arith.mulf %319, %328 : vector<8x128xf32>
    %330 = vector.broadcast %310 : vector<1x128xf32> to vector<8x128xf32>
    %331 = arith.mulf %329, %330 : vector<8x128xf32>
    %332 = vector.broadcast %311 : vector<1x128xf32> to vector<8x128xf32>
    %333 = arith.addf %331, %332 : vector<8x128xf32>
    %c896 = arith.constant 896 : index
    %c0_73 = arith.constant 0 : index
    %334 = vector.load %arg3[%c896, %c0_73] : memref<1152x128xf32, #tpu.memory_space<vmem>>, vector<128x128xf32>
    %cst_74 = arith.constant dense<0.000000e+00> : vector<8x128xf32>
    %335 = tpu.matmul %333, %334, %cst_74 {dimension_numbers = #tpu.dot_dimension_numbers<[1], [0], [0], [1], [0, 0, 1, 1], [], []>} : vector<8x128xf32>, vector<128x128xf32>, vector<8x128xf32> -> vector<8x128xf32>
    %336 = vector.extract_strided_slice %30 {offsets = [30, 0], sizes = [1, 128], strides = [1, 1]} : vector<40x128xf32> to vector<1x128xf32>
    %337 = vector.broadcast %336 : vector<1x128xf32> to vector<8x128xf32>
    %338 = arith.addf %335, %337 : vector<8x128xf32>
    %339 = arith.mulf %338, %338 : vector<8x128xf32>
    %340 = arith.mulf %338, %339 : vector<8x128xf32>
    %cst_75 = arith.constant 4.471500e-02 : f32
    %341 = vector.broadcast %cst_75 : f32 to vector<8x128xf32>
    %342 = arith.mulf %341, %340 : vector<8x128xf32>
    %343 = arith.addf %338, %342 : vector<8x128xf32>
    %cst_76 = arith.constant 0.797884583 : f32
    %344 = vector.broadcast %cst_76 : f32 to vector<8x128xf32>
    %345 = arith.mulf %344, %343 : vector<8x128xf32>
    %346 = math.tanh %345 : vector<8x128xf32>
    %cst_77 = arith.constant 1.000000e+00 : f32
    %347 = vector.broadcast %cst_77 : f32 to vector<8x128xf32>
    %348 = arith.addf %347, %346 : vector<8x128xf32>
    %cst_78 = arith.constant 5.000000e-01 : f32
    %349 = vector.broadcast %cst_78 : f32 to vector<8x128xf32>
    %350 = arith.mulf %349, %348 : vector<8x128xf32>
    %351 = arith.mulf %338, %350 : vector<8x128xf32>
    %c1024 = arith.constant 1024 : index
    %c0_79 = arith.constant 0 : index
    %352 = vector.load %arg3[%c1024, %c0_79] : memref<1152x128xf32, #tpu.memory_space<vmem>>, vector<128x128xf32>
    %cst_80 = arith.constant dense<0.000000e+00> : vector<8x128xf32>
    %353 = tpu.matmul %351, %352, %cst_80 {dimension_numbers = #tpu.dot_dimension_numbers<[1], [0], [0], [1], [0, 0, 1, 1], [], []>} : vector<8x128xf32>, vector<128x128xf32>, vector<8x128xf32> -> vector<8x128xf32>
    %354 = vector.extract_strided_slice %30 {offsets = [31, 0], sizes = [1, 128], strides = [1, 1]} : vector<40x128xf32> to vector<1x128xf32>
    %355 = vector.broadcast %354 : vector<1x128xf32> to vector<8x128xf32>
    %356 = arith.addf %353, %355 : vector<8x128xf32>
    %357 = arith.addf %333, %356 : vector<8x128xf32>
    %358 = vector.extract_strided_slice %30 {offsets = [32, 0], sizes = [1, 128], strides = [1, 1]} : vector<40x128xf32> to vector<1x128xf32>
    %359 = vector.extract_strided_slice %30 {offsets = [33, 0], sizes = [1, 128], strides = [1, 1]} : vector<40x128xf32> to vector<1x128xf32>
    %cst_81 = arith.constant dense<0.000000e+00> : vector<8xf32>
    %360 = vector.multi_reduction <add>, %357, %cst_81 [1] : vector<8x128xf32> to vector<8xf32>
    %361 = vector.shape_cast %360 : vector<8xf32> to vector<8x1xf32>
    %cst_82 = arith.constant 3.125000e-02 : f32
    %362 = vector.broadcast %cst_82 : f32 to vector<8x1xf32>
    %363 = arith.mulf %361, %362 : vector<8x1xf32>
    %364 = vector.broadcast %363 : vector<8x1xf32> to vector<8x128xf32>
    %365 = arith.subf %357, %364 : vector<8x128xf32>
    %366 = vector.broadcast %4 : vector<1x128xf32> to vector<8x128xf32>
    %367 = arith.mulf %365, %366 : vector<8x128xf32>
    %368 = arith.mulf %367, %367 : vector<8x128xf32>
    %cst_83 = arith.constant dense<0.000000e+00> : vector<8xf32>
    %369 = vector.multi_reduction <add>, %368, %cst_83 [1] : vector<8x128xf32> to vector<8xf32>
    %370 = vector.shape_cast %369 : vector<8xf32> to vector<8x1xf32>
    %cst_84 = arith.constant 3.125000e-02 : f32
    %371 = vector.broadcast %cst_84 : f32 to vector<8x1xf32>
    %372 = arith.mulf %370, %371 : vector<8x1xf32>
    %cst_85 = arith.constant 9.99999996E-13 : f32
    %373 = vector.broadcast %cst_85 : f32 to vector<8x1xf32>
    %374 = arith.addf %372, %373 : vector<8x1xf32>
    %375 = math.rsqrt %374 : vector<8x1xf32>
    %376 = vector.broadcast %375 : vector<8x1xf32> to vector<8x128xf32>
    %377 = arith.mulf %367, %376 : vector<8x128xf32>
    %378 = vector.broadcast %358 : vector<1x128xf32> to vector<8x128xf32>
    %379 = arith.mulf %377, %378 : vector<8x128xf32>
    %380 = vector.broadcast %359 : vector<1x128xf32> to vector<8x128xf32>
    %381 = arith.addf %379, %380 : vector<8x128xf32>
    %382 = vector.extract_strided_slice %381 {offsets = [0, 0], sizes = [1, 128], strides = [1, 1]} : vector<8x128xf32> to vector<1x128xf32>
    %c128 = arith.constant 128 : index
    %c0_86 = arith.constant 0 : index
    %383 = vector.load %arg3[%c128, %c0_86] : memref<1152x128xf32, #tpu.memory_space<vmem>>, vector<128x128xf32>
    %cst_87 = arith.constant dense<0.000000e+00> : vector<1x128xf32>
    %384 = tpu.matmul %382, %383, %cst_87 {dimension_numbers = #tpu.dot_dimension_numbers<[1], [0], [0], [1], [0, 0, 1, 1], [], []>} : vector<1x128xf32>, vector<128x128xf32>, vector<1x128xf32> -> vector<1x128xf32>
    %385 = vector.extract_strided_slice %30 {offsets = [12, 0], sizes = [1, 128], strides = [1, 1]} : vector<40x128xf32> to vector<1x128xf32>
    %386 = arith.addf %384, %385 : vector<1x128xf32>
    %387 = math.tanh %386 : vector<1x128xf32>
    %c256 = arith.constant 256 : index
    %c0_88 = arith.constant 0 : index
    %388 = vector.load %arg3[%c256, %c0_88] : memref<1152x128xf32, #tpu.memory_space<vmem>>, vector<128x128xf32>
    %cst_89 = arith.constant dense<0.000000e+00> : vector<1x128xf32>
    %389 = tpu.matmul %387, %388, %cst_89 {dimension_numbers = #tpu.dot_dimension_numbers<[1], [0], [0], [1], [0, 0, 1, 1], [], []>} : vector<1x128xf32>, vector<128x128xf32>, vector<1x128xf32> -> vector<1x128xf32>
    %390 = vector.extract_strided_slice %30 {offsets = [13, 0], sizes = [1, 128], strides = [1, 1]} : vector<40x128xf32> to vector<1x128xf32>
    %391 = arith.addf %389, %390 : vector<1x128xf32>
    %392 = vector.shape_cast %391 : vector<1x128xf32> to vector<1x1x128xf32>
    %c0_90 = arith.constant 0 : index
    %c0_91 = arith.constant 0 : index
    %c0_92 = arith.constant 0 : index
    %393 = vector.load %arg5[%c0_90, %c0_91, %c0_92] : memref<1x1x128xf32, #tpu.memory_space<vmem>>, vector<1x1x128xf32>
    tpu.vector_store %arg5[%c0_90, %c0_91, %c0_92], %392 {strides = array<i32>} : memref<1x1x128xf32, #tpu.memory_space<vmem>>, vector<1x1x128xf32>,
    return
  }
  func.func @transform_0(%arg0: i32) -> (i32, i32, i32) {
    %c0_i32 = arith.constant 0 : i32
    %c0_i32_0 = arith.constant 0 : i32
    %c0_i32_1 = arith.constant 0 : i32
    return %arg0, %c0_i32, %c0_i32_0 : i32, i32, i32
  }
  func.func @transform_1(%arg0: i32) -> (i32, i32) {
    %c0_i32 = arith.constant 0 : i32
    %c0_i32_0 = arith.constant 0 : i32
    %c0_i32_1 = arith.constant 0 : i32
    return %c0_i32, %c0_i32_0 : i32, i32
  }
  func.func @transform_2(%arg0: i32) -> (i32, i32) {
    %c0_i32 = arith.constant 0 : i32
    %c0_i32_0 = arith.constant 0 : i32
    %c0_i32_1 = arith.constant 0 : i32
    return %c0_i32, %c0_i32_0 : i32, i32
  }
  func.func @transform_3(%arg0: i32) -> (i32, i32, i32) {
    %c0_i32 = arith.constant 0 : i32
    %c0_i32_0 = arith.constant 0 : i32
    %c0_i32_1 = arith.constant 0 : i32
    %c0_i32_2 = arith.constant 0 : i32
    return %c0_i32, %c0_i32_0, %c0_i32_1 : i32, i32, i32
  }
  func.func @transform_4(%arg0: i32) -> (i32, i32, i32) {
    %c0_i32 = arith.constant 0 : i32
    %c0_i32_0 = arith.constant 0 : i32
    %c0_i32_1 = arith.constant 0 : i32
    return %arg0, %c0_i32, %c0_i32_0 : i32, i32, i32
  }
}

</mosaic_0001>

<llo_original>
// kernel: bert_idiomifier_forward.1
$region0: #{bert_idiomifier_forward.1}
  #allocation0 [shape = 'u32[]', space=smem, size = 0x4, offset = 0x4, fixed_abs, tag = 'smem constant byte address 0x4 - core index']
  #allocation1 [shape = 'u32[72,128]{1,0:T(1,128)}', space=vmem, size = 0x9000, scoped, tag = 'internal scratch']
  %s0 = inlined_call_operand.vmem [shape: f32[2,16,128], index: 0, kind: input, shape index: {}]
  %s1 = inlined_call_operand.vmem [shape: f32[40,128], index: 1, kind: input, shape index: {}]
  %s2 = inlined_call_operand.hbm [shape: f32[1152,128], index: 2, kind: input, shape index: {}]
  %s3 = inlined_call_operand.hbm [shape: f32[2,128,384], index: 3, kind: input, shape index: {}]
  %s4 = inlined_call_operand.hbm [shape: f32[2,1,128], index: 4, kind: output, shape index: {}]
  %s5 = sld [smem:[#allocation0]]
  $region57: #{bert_idiomifier_forward.1} parent=0
    _
  %s7 = ssub.s32 1, %s5
  %s8 = scalar_select 0, %s7, %s5
  $region1: #{bert_idiomifier_forward.1} parent=0
    #allocation2 [shape = 'u8[589824]{0}', space=vmem, size = 0x90000, scoped, tag = 'input window, operand 2, single buffered']
    #allocation3 [shape = 's32[2]{0}', space=sflag, size = 0x8, scoped, tag = 'scoped memory for bert_idiomifier_forward.1']
    #allocation4 [shape = 's32[2]{0}', space=sflag, size = 0x8, scoped, tag = 'scoped memory for bert_idiomifier_forward.1']
    #allocation5 [shape = 'u8[393216]{0}', space=vmem, size = 0x60000, scoped, tag = 'input window, operand 3, single buffered']
    #allocation6 [shape = 's32[1]{0}', space=sflag, size = 0x4, scoped, tag = 'scoped memory for bert_idiomifier_forward.1']
    #allocation7 [shape = 'u8[1024]{0}', space=vmem, size = 0x400, scoped, tag = 'output window, operand 0']
    %9 = vsyncpa [#allocation3], 0
    %10 = vsyncpa [#allocation6], 0
    %11 = vsyncpa [#allocation4], 0
    %s12 = scalar_lea.sflag [#allocation4], 1
    %13 = vsyncpa %s12, 0
    loop: start=0, step=1, limit=4
    $region2: #{bert_idiomifier_forward.1} parent=1 // loop_pre_header
      _
    $region3: #{bert_idiomifier_forward.1} parent=1 // loop_header
      %s15 = sphi 0, %s19
      %p16 = scmp.ge.s32.totalorder %s15, 4
      %s25 = sphi 0, %s27
      %s28 = sphi 0, %s25
      %s29 = sphi 0, %s28
      %s45 = sphi 0, %s29
      %s49 = sphi 0, %s49
      %s51 = sphi 0, %s49
      %s52 = sphi 0, %s51
      %s66 = sphi 0, %s52
      %s70 = sphi 0, %s70
      %s72 = sphi 0, %s70
      %s73 = sphi 0, %s72
      %s87 = sphi 0, %s73
      %s91 = sphi 0, %s91
      %s93 = sphi 0, %s91
      %s94 = sphi 0, %s93
      %s108 = sphi 0, %s94
      %s114 = sphi 0, %s116
      %s117 = sphi 0, %s114
      %s118 = sphi 0, %s117
      %s134 = sphi 0, %s118
    $region4: #{bert_idiomifier_forward.1} parent=1 // loop_header_branch
      %18 = sbr.rel (%p16) target = $region8
    $region5: #{bert_idiomifier_forward.1} parent=1 // loop_body
      %s20 = ssub.s32 %s15, 1
      %s21 = ssub.s32 %s15, 2
      %s22 = sadd.s32 %s15, 1
      %s23 = ssub.s32 %s15, %s22
      %p24 = scmp.eq.s32.totalorder %s23, 0
      %s26 = sadd.s32 %s25, 1
      %s27 = scalar_select %p24, %s25, %s26
      %p30 = pneg %p24
      %p31 = scmp.eq.s32.totalorder %s15, 1
      %p32 = por %p30, %p31
      %p33 = scmp.ne.s32.totalorder %s25, %s28
      %p34 = scmp.eq.s32.totalorder %s15, 0
      %p35 = por %p33, %p34
      %p36 = scmp.ne.s32.totalorder %s25, %s28
      %p37 = scmp.eq.s32.totalorder %s20, 1
      %p38 = por %p36, %p37
      %p39 = scmp.ne.s32.totalorder %s28, %s29
      %p40 = scmp.eq.s32.totalorder %s20, 0
      %p41 = por %p39, %p40
      %p42 = scmp.ne.s32.totalorder %s28, %s29
      %p43 = scmp.eq.s32.totalorder %s21, 1
      %p44 = por %p42, %p43
      %p46 = scmp.ne.s32.totalorder %s29, %s45
      %p47 = scmp.eq.s32.totalorder %s21, 0
      %p48 = por %p46, %p47
      %s50 = sadd.s32 %s49, 1
      %p53 = scmp.eq.s32.totalorder %s15, 1
      %p54 = scmp.ne.s32.totalorder %s49, %s51
      %p55 = scmp.eq.s32.totalorder %s15, 0
      %p56 = por %p54, %p55
      %p57 = scmp.ne.s32.totalorder %s49, %s51
      %p58 = scmp.eq.s32.totalorder %s20, 1
      %p59 = por %p57, %p58
      %p60 = scmp.ne.s32.totalorder %s51, %s52
      %p61 = scmp.eq.s32.totalorder %s20, 0
      %p62 = por %p60, %p61
      %p63 = scmp.ne.s32.totalorder %s51, %s52
      %p64 = scmp.eq.s32.totalorder %s21, 1
      %p65 = por %p63, %p64
      %p67 = scmp.ne.s32.totalorder %s52, %s66
      %p68 = scmp.eq.s32.totalorder %s21, 0
      %p69 = por %p67, %p68
      %s71 = sadd.s32 %s70, 1
      %p74 = scmp.eq.s32.totalorder %s15, 1
      %p75 = scmp.ne.s32.totalorder %s70, %s72
      %p76 = scmp.eq.s32.totalorder %s15, 0
      %p77 = por %p75, %p76
      %p78 = scmp.ne.s32.totalorder %s70, %s72
      %p79 = scmp.eq.s32.totalorder %s20, 1
      %p80 = por %p78, %p79
      %p81 = scmp.ne.s32.totalorder %s72, %s73
      %p82 = scmp.eq.s32.totalorder %s20, 0
      %p83 = por %p81, %p82
      %p84 = scmp.ne.s32.totalorder %s72, %s73
      %p85 = scmp.eq.s32.totalorder %s21, 1
      %p86 = por %p84, %p85
      %p88 = scmp.ne.s32.totalorder %s73, %s87
      %p89 = scmp.eq.s32.totalorder %s21, 0
      %p90 = por %p88, %p89
      %s92 = sadd.s32 %s91, 1
      %p95 = scmp.eq.s32.totalorder %s15, 1
      %p96 = scmp.ne.s32.totalorder %s91, %s93
      %p97 = scmp.eq.s32.totalorder %s15, 0
      %p98 = por %p96, %p97
      %p99 = scmp.ne.s32.totalorder %s91, %s93
      %p100 = scmp.eq.s32.totalorder %s20, 1
      %p101 = por %p99, %p100
      %p102 = scmp.ne.s32.totalorder %s93, %s94
      %p103 = scmp.eq.s32.totalorder %s20, 0
      %p104 = por %p102, %p103
      %p105 = scmp.ne.s32.totalorder %s93, %s94
      %p106 = scmp.eq.s32.totalorder %s21, 1
      %p107 = por %p105, %p106
      %p109 = scmp.ne.s32.totalorder %s94, %s108
      %p110 = scmp.eq.s32.totalorder %s21, 0
      %p111 = por %p109, %p110
      %s112 = ssub.s32 %s15, %s22
      %p113 = scmp.eq.s32.totalorder %s112, 0
      %s115 = sadd.s32 %s114, 1
      %s116 = scalar_select %p113, %s114, %s115
      %p119 = pneg %p113
      %p120 = scmp.eq.s32.totalorder %s15, 1
      %p121 = por %p119, %p120
      %p122 = scmp.ne.s32.totalorder %s114, %s117
      %p123 = scmp.eq.s32.totalorder %s15, 0
      %p124 = por %p122, %p123
      %p125 = scmp.ne.s32.totalorder %s114, %s117
      %p126 = scmp.eq.s32.totalorder %s20, 1
      %p127 = por %p125, %p126
      %p128 = scmp.ne.s32.totalorder %s117, %s118
      %p129 = scmp.eq.s32.totalorder %s20, 0
      %p130 = por %p128, %p129
      %p131 = scmp.ne.s32.totalorder %s117, %s118
      %p132 = scmp.eq.s32.totalorder %s21, 1
      %p133 = por %p131, %p132
      %p135 = scmp.ne.s32.totalorder %s118, %s134
      %p136 = scmp.eq.s32.totalorder %s21, 0
      %p137 = por %p135, %p136
      %p138 = scmp.le.s32.totalorder 1, %s15
      %p139 = scmp.lt.s32.totalorder %s15, 3
      %p140 = pnand %p138, %p139
      %p141 = pneg %p140
      // Predicated region
      $region9: #{bert_idiomifier_forward.1} parent=5 // pred_check
        _
      $region10: #{bert_idiomifier_forward.1} parent=5 // pred_check_branch
        %143 = sbr.rel (%p140) target = $region12
      $region11: #{bert_idiomifier_forward.1} parent=5 // pred_region
        %s144 = ssub.s32 %s15, 1
        // Predicated region
        $region13: #{bert_idiomifier_forward.1} parent=11 // pred_check
          %p145 = pneg %p62
        $region14: #{bert_idiomifier_forward.1} parent=11 // pred_check_branch
          %147 = sbr.rel (%p145) target = $region16
        $region15: #{bert_idiomifier_forward.1} parent=11 // pred_region
          _
        $region16: #{bert_idiomifier_forward.1} parent=11 // pred_fallthru
          _
        // Predicated region
        $region17: #{bert_idiomifier_forward.1} parent=11 // pred_check
          %p148 = pneg %p83
        $region18: #{bert_idiomifier_forward.1} parent=11 // pred_check_branch
          %150 = sbr.rel (%p148) target = $region20
        $region19: #{bert_idiomifier_forward.1} parent=11 // pred_region
          %152 = vsyncadd [#allocation3], 0
          %s153 = sshll.u32 %s2, 4
          %s154 = int_to_ptr.hbm [resolvable:$true] %s153
          %s155 = sshll.u32 [#allocation2], 4
          %s156 = int_to_ptr.vmem [resolvable:$true] %s155
          %161 = dma.hbm_to_vmem [thread:$0]  %s154, 18432, %s156, [#allocation3], 128, 128, 8
        $region20: #{bert_idiomifier_forward.1} parent=11 // pred_fallthru
          _
        // Predicated region
        $region21: #{bert_idiomifier_forward.1} parent=11 // pred_check
          %p162 = pneg %p104
        $region22: #{bert_idiomifier_forward.1} parent=11 // pred_check_branch
          %164 = sbr.rel (%p162) target = $region24
        $region23: #{bert_idiomifier_forward.1} parent=11 // pred_region
          %166 = vsyncadd [#allocation6], 0
          %s167 = sshll.u32 %s3, 4
          %s168 = int_to_ptr.hbm [resolvable:$true] %s167
          %s169 = sshll.u32 [#allocation5], 4
          %s170 = int_to_ptr.vmem [resolvable:$true] %s169
          %175 = dma.hbm_to_vmem [thread:$0]  %s168, 12288, %s170, [#allocation6], 384, 384, 24
        $region24: #{bert_idiomifier_forward.1} parent=11 // pred_fallthru
          _
      $region12: #{bert_idiomifier_forward.1} parent=5 // pred_fallthru
        _
      %p176 = scmp.lt.s32.totalorder %s15, 2
      // Predicated region
      $region25: #{bert_idiomifier_forward.1} parent=5 // pred_check
        %p177 = pneg %p176
      $region26: #{bert_idiomifier_forward.1} parent=5 // pred_check_branch
        %179 = sbr.rel (%p177) target = $region28
      $region27: #{bert_idiomifier_forward.1} parent=5 // pred_region
        // Predicated region
        $region29: #{bert_idiomifier_forward.1} parent=27 // pred_check
          %p180 = pneg %p35
        $region30: #{bert_idiomifier_forward.1} parent=27 // pred_check_branch
          %182 = sbr.rel (%p180) target = $region32
        $region31: #{bert_idiomifier_forward.1} parent=27 // pred_region
          %p183 = scmp.lt.s32.totalorder %s15, 1
          %s184 = scalar_select %p183, %s15, 1
          %s185 = smul.addr %s184, 2
          %s186 = smul.addr %s185, 8
          %s187 = scalar_lea.vmem %s0, %s186
        $region32: #{bert_idiomifier_forward.1} parent=27 // pred_fallthru
          _
      $region28: #{bert_idiomifier_forward.1} parent=5 // pred_fallthru
        _
      %p188 = scmp.le.s32.totalorder 1, %s15
      %p189 = scmp.lt.s32.totalorder %s15, 3
      %p190 = pnand %p188, %p189
      %p191 = pneg %p190
      // Predicated region
      $region33: #{bert_idiomifier_forward.1} parent=5 // pred_check
        _
      $region34: #{bert_idiomifier_forward.1} parent=5 // pred_check_branch
        %193 = sbr.rel (%p190) target = $region36
      $region35: #{bert_idiomifier_forward.1} parent=5 // pred_region
        %s194 = ssub.s32 %s15, 1
        // Predicated region
        $region37: #{bert_idiomifier_forward.1} parent=35 // pred_check
          %p195 = pneg %p83
        $region38: #{bert_idiomifier_forward.1} parent=35 // pred_check_branch
          %197 = sbr.rel (%p195) target = $region40
        $region39: #{bert_idiomifier_forward.1} parent=35 // pred_region
          %199 = dma.done [#allocation3], 18432
        $region40: #{bert_idiomifier_forward.1} parent=35 // pred_fallthru
          _
        // Predicated region
        $region41: #{bert_idiomifier_forward.1} parent=35 // pred_check
          %p200 = pneg %p104
        $region42: #{bert_idiomifier_forward.1} parent=35 // pred_check_branch
          %202 = sbr.rel (%p200) target = $region44
        $region43: #{bert_idiomifier_forward.1} parent=35 // pred_region
          %204 = dma.done [#allocation6], 12288
        $region44: #{bert_idiomifier_forward.1} parent=35 // pred_fallthru
          _
        %p205 = scmp.lt.s32.totalorder %s20, 1
        %s206 = scalar_select %p205, %s20, 1
        %s207 = smul.addr %s206, 2
        %s208 = smul.addr %s207, 8
        %s209 = scalar_lea.vmem %s0, %s208
        %p210 = pneg %p41
        %p211 = pneg %p38
        %p212 = pneg %p62
        %p213 = pneg %p59
        %p214 = pneg %p83
        %p215 = pneg %p80
        %p216 = pneg %p104
        %p217 = pneg %p101
        %p218 = pneg %p130
        %p219 = pneg %p127
        %s220 = sand.u32 %s117, 1
        %s221 = scalar_lea.sflag [#allocation4], %s220
        %s222 = sand.u32 %s117, 1
        %s223 = scalar_lea.vmem [#allocation7], %s222
        %p224 = scmp.lt.s32.totalorder %s20, 1
        %s225 = scalar_select %p224, %s20, 1
        %s226 = smul.addr %s225, 2
        %s227 = smul.addr %s226, 8
        %s228 = scalar_lea.vmem %s0, %s227
        %v229 = vlaneseq
        %v230 = vand.u32 %v229, 127
        %vm231 = vcmp.lt.s32.totalorder %v230, 32
        %v232 = vsel %vm231, 1, 0
        %v233 = vcvt.s32.f32 %v232
        %vm234 = vcmp.ge.s32.totalorder %v230, 0
        %vm235 = vcmp.lt.s32.totalorder %v230, 16
        %vm236 = vmand %vm234, %vm235
        %v237 = vsel %vm236, 1, 0
        %v238 = vcvt.s32.f32 %v237
        %vm239 = vcmp.ge.s32.totalorder %v230, 16
        %vm240 = vmand %vm239, %vm231
        %v241 = vsel %vm240, 1, 0
        %v242 = vcvt.s32.f32 %v241
        %vm243 = vcmp.lt.s32.totalorder %v230, 8
        %vm244 = vmand %vm234, %vm243
        %vm245 = vcmp.ge.s32.totalorder %v230, 8
        %vm246 = vmand %vm245, %vm235
        %v247 = vld [vmem:[%s1] sm:$0xff]
        %v248 = vld [vmem:[%s1 + $0x8] sm:$0xff]
        %v249 = vld [vmem:[%s1 + $0x10] sm:$0xff]
        %v250 = vld [vmem:[%s1 + $0x18] sm:$0xff]
        %v251 = vld [vmem:[%s1 + $0x20] sm:$0xff]
        %v252 = vld [vmem:[%s228] sm:$0xff]
        %v253 = vld [vmem:[%s228 + $0x8] sm:$0xff]
        %v254 = vcvt.f32.s32.to.zero.pseudo %v252
        %255 = vset.pattern.permute.xlu0 0
        %256 = vperm.xlu0 %255, %v254
        %v257 = vpop.permute.xlu0 %256
        %vm258 = vcmp.eq.s32.totalorder %v257, %v230
        %v259 = vsel %vm258, 1, 0
        %v260 = vcvt.s32.f32 %v259
        %v261 = vld [vmem:[#allocation2] sm:$0xff]
        %v262 = vld [vmem:[#allocation2 + $0x8] sm:$0xff]
        %v263 = vld [vmem:[#allocation2 + $0x10] sm:$0xff]
        %v264 = vld [vmem:[#allocation2 + $0x18] sm:$0xff]
        %v265 = vld [vmem:[#allocation2 + $0x20] sm:$0xff]
        %v266 = vld [vmem:[#allocation2 + $0x28] sm:$0xff]
        %v267 = vld [vmem:[#allocation2 + $0x30] sm:$0xff]
        %v268 = vld [vmem:[#allocation2 + $0x38] sm:$0xff]
        %v269 = vld [vmem:[#allocation2 + $0x40] sm:$0xff]
        %v270 = vld [vmem:[#allocation2 + $0x48] sm:$0xff]
        %v271 = vld [vmem:[#allocation2 + $0x50] sm:$0xff]
        %v272 = vld [vmem:[#allocation2 + $0x58] sm:$0xff]
        %v273 = vld [vmem:[#allocation2 + $0x60] sm:$0xff]
        %v274 = vld [vmem:[#allocation2 + $0x68] sm:$0xff]
        %v275 = vld [vmem:[#allocation2 + $0x70] sm:$0xff]
        %v276 = vld [vmem:[#allocation2 + $0x78] sm:$0xff]
        %v277 = vsub.f32 1.0, %v252
        %v278 = vperm.slane %v248, 0
        %280 = vset.pattern.permute.xlu0 1
        %281 = vperm.xlu0 %280, %v277
        %v282 = vpop.permute.xlu0 %281
        %v284 = vmul.f32 %v278, %v282
        %285 = vmatpush.msra.mxu0 %v276
        %286 = vmatpush.msra.mxu0 %v275
        %287 = vmatpush.msra.mxu0 %v274
        %288 = vmatpush.msra.mxu0 %v273
        %289 = vmatpush.msra.mxu0 %v272
        %290 = vmatpush.msra.mxu0 %v271
        %291 = vmatpush.msra.mxu0 %v270
        %292 = vmatpush.msra.mxu0 %v269
        %293 = vmatpush.msra.mxu0 %v268
        %294 = vmatpush.msra.mxu0 %v267
        %295 = vmatpush.msra.mxu0 %v266
        %296 = vmatpush.msra.mxu0 %v265
        %297 = vmatpush.msra.mxu0 %v264
        %298 = vmatpush.msra.mxu0 %v263
        %299 = vmatpush.msra.mxu0 %v262
        %300 = vmatpush.msra.mxu0 %v261
        %301 = vmatmul.f32.gmra.mxu0 %v260
        %v302 = vpop.f32.mrf.mxu0
        %v303 = vadd.f32 %v284, %v302
        %304 = vdwg.mxu0
        %v305 = vperm.slane %v248, 1
        %307 = vset.pattern.permute.xlu0 1
        %308 = vperm.xlu0 %307, %v252
        %v309 = vpop.permute.xlu0 %308
        %v311 = vmul.f32 %v305, %v309
        %v312 = vadd.f32 %v303, %v311
        %v313 = vadd.f32 %v312, %v247
        %314 = vadd.xlane.f32.xlu0 %v313
        %v315 = vpop.xlane.xlu0 %314
        %v316 = vmul.f32 %v315, 0.03125
        %v317 = vsub.f32 %v313, %v316
        %v318 = vmul.f32 %v317, %v233
        %v319 = vmul.f32 %v318, %v318
        %320 = vadd.xlane.f32.xlu0 %v319
        %v321 = vpop.xlane.xlu0 %320
        %v322 = vmul.f32 %v321, 0.03125
        %v323 = vadd.f32 %v322, 1e-12
        %v324 = vrsqrt.pop %v323
        %v325 = vmul.f32 %v324, %v323
        %v326 = vmul.f32 %v325, %v324
        %v327 = vmul.f32 0.5, %v326
        %v328 = vsub.f32 1.5, %v327
        %v329 = vmul.f32 %v324, %v328
        %vm330 = vweird.f32 %v323
        %vm331 = vweird.f32 %v324
        %vm332 = vmor %vm330, %vm331
        %v333 = vsel %vm332, %v324, %v329
        %v334 = vmul.f32 %v318, %v333
        %v335 = vperm.slane %v248, 2
        %v336 = vmul.f32 %v334, %v335
        %v337 = vperm.slane %v248, 3
        %v338 = vadd.f32 %v336, %v337
        %v339 = vld [vmem:[#allocation5] sm:$0xff]
        %v340 = vld [vmem:[#allocation5 + $0x8] sm:$0xff]
        %v341 = vld [vmem:[#allocation5 + $0x10] sm:$0xff]
        %v342 = vld [vmem:[#allocation5 + $0x18] sm:$0xff]
        %v343 = vld [vmem:[#allocation5 + $0x20] sm:$0xff]
        %v344 = vld [vmem:[#allocation5 + $0x28] sm:$0xff]
        %v345 = vld [vmem:[#allocation5 + $0x30] sm:$0xff]
        %v346 = vld [vmem:[#allocation5 + $0x38] sm:$0xff]
        %v347 = vld [vmem:[#allocation5 + $0x40] sm:$0xff]
        %v348 = vld [vmem:[#allocation5 + $0x48] sm:$0xff]
        %v349 = vld [vmem:[#allocation5 + $0x50] sm:$0xff]
        %v350 = vld [vmem:[#allocation5 + $0x58] sm:$0xff]
        %v351 = vld [vmem:[#allocation5 + $0x60] sm:$0xff]
        %v352 = vld [vmem:[#allocation5 + $0x68] sm:$0xff]
        %v353 = vld [vmem:[#allocation5 + $0x70] sm:$0xff]
        %v354 = vld [vmem:[#allocation5 + $0x78] sm:$0xff]
        %v355 = vld [vmem:[#allocation5 + $0x80] sm:$0xff]
        %v356 = vld [vmem:[#allocation5 + $0x88] sm:$0xff]
        %v357 = vld [vmem:[#allocation5 + $0x90] sm:$0xff]
        %v358 = vld [vmem:[#allocation5 + $0x98] sm:$0xff]
        %v359 = vld [vmem:[#allocation5 + $0xa0] sm:$0xff]
        %v360 = vld [vmem:[#allocation5 + $0xa8] sm:$0xff]
        %v361 = vld [vmem:[#allocation5 + $0xb0] sm:$0xff]
        %v362 = vld [vmem:[#allocation5 + $0xb8] sm:$0xff]
        %v363 = vld [vmem:[#allocation5 + $0xc0] sm:$0xff]
        %v364 = vld [vmem:[#allocation5 + $0xc8] sm:$0xff]
        %v365 = vld [vmem:[#allocation5 + $0xd0] sm:$0xff]
        %v366 = vld [vmem:[#allocation5 + $0xd8] sm:$0xff]
        %v367 = vld [vmem:[#allocation5 + $0xe0] sm:$0xff]
        %v368 = vld [vmem:[#allocation5 + $0xe8] sm:$0xff]
        %v369 = vld [vmem:[#allocation5 + $0xf0] sm:$0xff]
        %v370 = vld [vmem:[#allocation5 + $0xf8] sm:$0xff]
        %v371 = vld [vmem:[#allocation5 + $0x100] sm:$0xff]
        %v372 = vld [vmem:[#allocation5 + $0x108] sm:$0xff]
        %v373 = vld [vmem:[#allocation5 + $0x110] sm:$0xff]
        %v374 = vld [vmem:[#allocation5 + $0x118] sm:$0xff]
        %v375 = vld [vmem:[#allocation5 + $0x120] sm:$0xff]
        %v376 = vld [vmem:[#allocation5 + $0x128] sm:$0xff]
        %v377 = vld [vmem:[#allocation5 + $0x130] sm:$0xff]
        %v378 = vld [vmem:[#allocation5 + $0x138] sm:$0xff]
        %v379 = vld [vmem:[#allocation5 + $0x140] sm:$0xff]
        %v380 = vld [vmem:[#allocation5 + $0x148] sm:$0xff]
        %v381 = vld [vmem:[#allocation5 + $0x150] sm:$0xff]
        %v382 = vld [vmem:[#allocation5 + $0x158] sm:$0xff]
        %v383 = vld [vmem:[#allocation5 + $0x160] sm:$0xff]
        %v384 = vld [vmem:[#allocation5 + $0x168] sm:$0xff]
        %v385 = vld [vmem:[#allocation5 + $0x170] sm:$0xff]
        %v386 = vld [vmem:[#allocation5 + $0x178] sm:$0xff]
        %387 = vmatpush.msra.mxu0 %v384
        %388 = vmatpush.msra.mxu0 %v381
        %389 = vmatpush.msra.mxu0 %v378
        %390 = vmatpush.msra.mxu0 %v375
        %391 = vmatpush.msra.mxu0 %v372
        %392 = vmatpush.msra.mxu0 %v369
        %393 = vmatpush.msra.mxu0 %v366
        %394 = vmatpush.msra.mxu0 %v363
        %395 = vmatpush.msra.mxu0 %v360
        %396 = vmatpush.msra.mxu0 %v357
        %397 = vmatpush.msra.mxu0 %v354
        %398 = vmatpush.msra.mxu0 %v351
        %399 = vmatpush.msra.mxu0 %v348
        %400 = vmatpush.msra.mxu0 %v345
        %401 = vmatpush.msra.mxu0 %v342
        %402 = vmatpush.msra.mxu0 %v339
        %403 = vmatmul.f32.gmra.mxu0 %v338
        %v404 = vpop.f32.mrf.mxu0
        %v405 = vadd.f32 0.0, %v404
        %406 = vdwg.mxu0
        %407 = vmatpush.msra.mxu0 %v385
        %408 = vmatpush.msra.mxu0 %v382
        %409 = vmatpush.msra.mxu0 %v379
        %410 = vmatpush.msra.mxu0 %v376
        %411 = vmatpush.msra.mxu0 %v373
        %412 = vmatpush.msra.mxu0 %v370
        %413 = vmatpush.msra.mxu0 %v367
        %414 = vmatpush.msra.mxu0 %v364
        %415 = vmatpush.msra.mxu0 %v361
        %416 = vmatpush.msra.mxu0 %v358
        %417 = vmatpush.msra.mxu0 %v355
        %418 = vmatpush.msra.mxu0 %v352
        %419 = vmatpush.msra.mxu0 %v349
        %420 = vmatpush.msra.mxu0 %v346
        %421 = vmatpush.msra.mxu0 %v343
        %422 = vmatpush.msra.mxu0 %v340
        %423 = vmatmul.f32.gmra.mxu0 %v338
        %v424 = vpop.f32.mrf.mxu0
        %v425 = vadd.f32 0.0, %v424
        %426 = vdwg.mxu0
        %427 = vmatpush.msra.mxu0 %v386
        %428 = vmatpush.msra.mxu0 %v383
        %429 = vmatpush.msra.mxu0 %v380
        %430 = vmatpush.msra.mxu0 %v377
        %431 = vmatpush.msra.mxu0 %v374
        %432 = vmatpush.msra.mxu0 %v371
        %433 = vmatpush.msra.mxu0 %v368
        %434 = vmatpush.msra.mxu0 %v365
        %435 = vmatpush.msra.mxu0 %v362
        %436 = vmatpush.msra.mxu0 %v359
        %437 = vmatpush.msra.mxu0 %v356
        %438 = vmatpush.msra.mxu0 %v353
        %439 = vmatpush.msra.mxu0 %v350
        %440 = vmatpush.msra.mxu0 %v347
        %441 = vmatpush.msra.mxu0 %v344
        %442 = vmatpush.msra.mxu0 %v341
        %443 = vmatmul.f32.gmra.mxu0 %v338
        %v444 = vpop.f32.mrf.mxu0
        %v445 = vadd.f32 0.0, %v444
        %446 = vdwg.mxu0
        %v447 = vperm.slane %v248, 6
        %v448 = vadd.f32 %v405, %v447
        %v449 = vperm.slane %v248, 7
        %v450 = vadd.f32 %v425, %v449
        %v451 = vperm.slane %v249, 0
        %v452 = vadd.f32 %v445, %v451
        %v453 = vmul.f32 %v450, %v238
        %v454 = vmul.f32 %v450, %v242
        %v455 = vmul.f32 %v452, %v238
        %v456 = vmul.f32 %v452, %v242
        %457 = vmatpush.xpose.msra.mxu0 0.0
        %458 = vmatpush.xpose.msra.mxu0 0.0
        %459 = vmatpush.xpose.msra.mxu0 0.0
        %460 = vmatpush.xpose.msra.mxu0 0.0
        %461 = vmatpush.xpose.msra.mxu0 0.0
        %462 = vmatpush.xpose.msra.mxu0 0.0
        %463 = vmatpush.xpose.msra.mxu0 0.0
        %464 = vmatpush.xpose.msra.mxu0 0.0
        %465 = vmatpush.xpose.msra.mxu0 0.0
        %466 = vmatpush.xpose.msra.mxu0 0.0
        %467 = vmatpush.xpose.msra.mxu0 0.0
        %468 = vmatpush.xpose.msra.mxu0 0.0
        %469 = vmatpush.xpose.msra.mxu0 0.0
        %470 = vmatpush.xpose.msra.mxu0 0.0
        %471 = vmatpush.xpose.msra.mxu0 %v454
        %472 = vmatpush.xpose.msra.mxu0 %v453
        %473 = vmatmul.f32.gmra.mxu0 %v448
        %v474 = vpop.f32.mrf.mxu0
        %v475 = vadd.f32 0.0, %v474
        %476 = vdwg.mxu0
        %v477 = vmul.f32 %v475, 0.25
        %v478 = vperm.slane %v253, 0
        %v479 = vadd.f32 %v477, %v478
        %v480 = vsel %vm244, %v479, -1e+30
        %vm481 = vcmask 130048
        %v482 = vsel %vm481, %v480, -inf
        %483 = vmax.xlane.f32.xlu0 %v482
        %v484 = vpop.xlane.xlu0 %483
        %v485 = vsel %vm244, 1, 0
        %v486 = vcvt.s32.f32 %v485
        %v487 = vmul.f32 %v484, %v486
        %v488 = vadd.f32 %v487, 0.0
        %v489 = vsel %vm246, %v479, -1e+30
        %v490 = vsel %vm481, %v489, -inf
        %491 = vmax.xlane.f32.xlu0 %v490
        %v492 = vpop.xlane.xlu0 %491
        %v493 = vsel %vm246, 1, 0
        %v494 = vcvt.s32.f32 %v493
        %v495 = vmul.f32 %v492, %v494
        %v496 = vadd.f32 %v488, %v495
        %v497 = vsub.f32 %v479, %v496
        %v498 = vmul.f32 %v497, 1.442695
        %v499 = vpow.pop %v498
        %v500 = vmul.f32 %v499, %v486
        %v501 = vsel %vm481, %v500, 0.0
        %502 = vadd.xlane.f32.xlu0 %v501
        %v503 = vpop.xlane.xlu0 %502
        %v504 = vrcp.pop %v503
        %v505 = vmul.f32 %v504, %v486
        %v506 = vadd.f32 %v505, 0.0
        %v507 = vmul.f32 %v499, %v494
        %v508 = vsel %vm481, %v507, 0.0
        %509 = vadd.xlane.f32.xlu0 %v508
        %v510 = vpop.xlane.xlu0 %509
        %v511 = vrcp.pop %v510
        %v512 = vmul.f32 %v511, %v494
        %v513 = vadd.f32 %v506, %v512
        %v514 = vmul.f32 %v499, %v513
        %v516 = vsel %vm481, %v514, 0
        %518 = vmatpush.msra.mxu0 0.0
        %519 = vmatpush.msra.mxu0 0.0
        %520 = vmatpush.msra.mxu0 0.0
        %521 = vmatpush.msra.mxu0 0.0
        %522 = vmatpush.msra.mxu0 0.0
        %523 = vmatpush.msra.mxu0 0.0
        %524 = vmatpush.msra.mxu0 0.0
        %525 = vmatpush.msra.mxu0 0.0
        %526 = vmatpush.msra.mxu0 0.0
        %527 = vmatpush.msra.mxu0 0.0
        %528 = vmatpush.msra.mxu0 0.0
        %529 = vmatpush.msra.mxu0 0.0
        %530 = vmatpush.msra.mxu0 0.0
        %531 = vmatpush.msra.mxu0 0.0
        %532 = vmatpush.msra.mxu0 %v456
        %533 = vmatpush.msra.mxu0 %v455
        %534 = vmatmul.f32.gmra.mxu0 %v516
        %v535 = vpop.f32.mrf.mxu0
        %v536 = vadd.f32 0.0, %v535
        %537 = vdwg.mxu0
        %v538 = vld [vmem:[#allocation2 + $0x180] sm:$0xff]
        %v539 = vld [vmem:[#allocation2 + $0x188] sm:$0xff]
        %v540 = vld [vmem:[#allocation2 + $0x190] sm:$0xff]
        %v541 = vld [vmem:[#allocation2 + $0x198] sm:$0xff]
        %v542 = vld [vmem:[#allocation2 + $0x1a0] sm:$0xff]
        %v543 = vld [vmem:[#allocation2 + $0x1a8] sm:$0xff]
        %v544 = vld [vmem:[#allocation2 + $0x1b0] sm:$0xff]
        %v545 = vld [vmem:[#allocation2 + $0x1b8] sm:$0xff]
        %v546 = vld [vmem:[#allocation2 + $0x1c0] sm:$0xff]
        %v547 = vld [vmem:[#allocation2 + $0x1c8] sm:$0xff]
        %v548 = vld [vmem:[#allocation2 + $0x1d0] sm:$0xff]
        %v549 = vld [vmem:[#allocation2 + $0x1d8] sm:$0xff]
        %v550 = vld [vmem:[#allocation2 + $0x1e0] sm:$0xff]
        %v551 = vld [vmem:[#allocation2 + $0x1e8] sm:$0xff]
        %v552 = vld [vmem:[#allocation2 + $0x1f0] sm:$0xff]
        %v553 = vld [vmem:[#allocation2 + $0x1f8] sm:$0xff]
        %v554 = vperm.slane %v249, 1
        %555 = vmatpush.msra.mxu0 %v553
        %556 = vmatpush.msra.mxu0 %v552
        %557 = vmatpush.msra.mxu0 %v551
        %558 = vmatpush.msra.mxu0 %v550
        %559 = vmatpush.msra.mxu0 %v549
        %560 = vmatpush.msra.mxu0 %v548
        %561 = vmatpush.msra.mxu0 %v547
        %562 = vmatpush.msra.mxu0 %v546
        %563 = vmatpush.msra.mxu0 %v545
        %564 = vmatpush.msra.mxu0 %v544
        %565 = vmatpush.msra.mxu0 %v543
        %566 = vmatpush.msra.mxu0 %v542
        %567 = vmatpush.msra.mxu0 %v541
        %568 = vmatpush.msra.mxu0 %v540
        %569 = vmatpush.msra.mxu0 %v539
        %570 = vmatpush.msra.mxu0 %v538
        %571 = vmatmul.f32.gmra.mxu0 %v536
        %v572 = vpop.f32.mrf.mxu0
        %v573 = vadd.f32 %v554, %v572
        %574 = vdwg.mxu0
        %v575 = vadd.f32 %v338, %v573
        %576 = vadd.xlane.f32.xlu0 %v575
        %v577 = vpop.xlane.xlu0 %576
        %v578 = vmul.f32 %v577, 0.03125
        %v579 = vsub.f32 %v575, %v578
        %v580 = vmul.f32 %v579, %v233
        %v581 = vmul.f32 %v580, %v580
        %582 = vadd.xlane.f32.xlu0 %v581
        %v583 = vpop.xlane.xlu0 %582
        %v584 = vmul.f32 %v583, 0.03125
        %v585 = vadd.f32 %v584, 1e-12
        %v586 = vrsqrt.pop %v585
        %v587 = vmul.f32 %v586, %v585
        %v588 = vmul.f32 %v587, %v586
        %v589 = vmul.f32 0.5, %v588
        %v590 = vsub.f32 1.5, %v589
        %v591 = vmul.f32 %v586, %v590
        %vm592 = vweird.f32 %v585
        %vm593 = vweird.f32 %v586
        %vm594 = vmor %vm592, %vm593
        %v595 = vsel %vm594, %v586, %v591
        %v596 = vmul.f32 %v580, %v595
        %v597 = vperm.slane %v249, 2
        %v598 = vmul.f32 %v596, %v597
        %v599 = vperm.slane %v249, 3
        %v600 = vadd.f32 %v598, %v599
        %v601 = vld [vmem:[#allocation2 + $0x200] sm:$0xff]
        %v602 = vld [vmem:[#allocation2 + $0x208] sm:$0xff]
        %v603 = vld [vmem:[#allocation2 + $0x210] sm:$0xff]
        %v604 = vld [vmem:[#allocation2 + $0x218] sm:$0xff]
        %v605 = vld [vmem:[#allocation2 + $0x220] sm:$0xff]
        %v606 = vld [vmem:[#allocation2 + $0x228] sm:$0xff]
        %v607 = vld [vmem:[#allocation2 + $0x230] sm:$0xff]
        %v608 = vld [vmem:[#allocation2 + $0x238] sm:$0xff]
        %v609 = vld [vmem:[#allocation2 + $0x240] sm:$0xff]
        %v610 = vld [vmem:[#allocation2 + $0x248] sm:$0xff]
        %v611 = vld [vmem:[#allocation2 + $0x250] sm:$0xff]
        %v612 = vld [vmem:[#allocation2 + $0x258] sm:$0xff]
        %v613 = vld [vmem:[#allocation2 + $0x260] sm:$0xff]
        %v614 = vld [vmem:[#allocation2 + $0x268] sm:$0xff]
        %v615 = vld [vmem:[#allocation2 + $0x270] sm:$0xff]
        %v616 = vld [vmem:[#allocation2 + $0x278] sm:$0xff]
        %v617 = vperm.slane %v249, 4
        %618 = vmatpush.msra.mxu0 %v616
        %619 = vmatpush.msra.mxu0 %v615
        %620 = vmatpush.msra.mxu0 %v614
        %621 = vmatpush.msra.mxu0 %v613
        %622 = vmatpush.msra.mxu0 %v612
        %623 = vmatpush.msra.mxu0 %v611
        %624 = vmatpush.msra.mxu0 %v610
        %625 = vmatpush.msra.mxu0 %v609
        %626 = vmatpush.msra.mxu0 %v608
        %627 = vmatpush.msra.mxu0 %v607
        %628 = vmatpush.msra.mxu0 %v606
        %629 = vmatpush.msra.mxu0 %v605
        %630 = vmatpush.msra.mxu0 %v604
        %631 = vmatpush.msra.mxu0 %v603
        %632 = vmatpush.msra.mxu0 %v602
        %633 = vmatpush.msra.mxu0 %v601
        %634 = vmatmul.f32.gmra.mxu0 %v600
        %v635 = vpop.f32.mrf.mxu0
        %v636 = vadd.f32 %v617, %v635
        %637 = vdwg.mxu0
        %v638 = vmul.f32 %v636, %v636
        %v639 = vmul.f32 %v636, %v638
        %v640 = vmul.f32 %v639, 0.044715
        %v641 = vadd.f32 %v636, %v640
        %v642 = vmul.f32 %v641, 0.7978846
        %v643 = vtanh.pop %v642
        %v644 = vadd.f32 %v643, 1.0
        %v645 = vmul.f32 %v644, 0.5
        %v646 = vmul.f32 %v636, %v645
        %v647 = vld [vmem:[#allocation2 + $0x280] sm:$0xff]
        %v648 = vld [vmem:[#allocation2 + $0x288] sm:$0xff]
        %v649 = vld [vmem:[#allocation2 + $0x290] sm:$0xff]
        %v650 = vld [vmem:[#allocation2 + $0x298] sm:$0xff]
        %v651 = vld [vmem:[#allocation2 + $0x2a0] sm:$0xff]
        %v652 = vld [vmem:[#allocation2 + $0x2a8] sm:$0xff]
        %v653 = vld [vmem:[#allocation2 + $0x2b0] sm:$0xff]
        %v654 = vld [vmem:[#allocation2 + $0x2b8] sm:$0xff]
        %v655 = vld [vmem:[#allocation2 + $0x2c0] sm:$0xff]
        %v656 = vld [vmem:[#allocation2 + $0x2c8] sm:$0xff]
        %v657 = vld [vmem:[#allocation2 + $0x2d0] sm:$0xff]
        %v658 = vld [vmem:[#allocation2 + $0x2d8] sm:$0xff]
        %v659 = vld [vmem:[#allocation2 + $0x2e0] sm:$0xff]
        %v660 = vld [vmem:[#allocation2 + $0x2e8] sm:$0xff]
        %v661 = vld [vmem:[#allocation2 + $0x2f0] sm:$0xff]
        %v662 = vld [vmem:[#allocation2 + $0x2f8] sm:$0xff]
        %v663 = vperm.slane %v249, 5
        %664 = vmatpush.msra.mxu0 %v662
        %665 = vmatpush.msra.mxu0 %v661
        %666 = vmatpush.msra.mxu0 %v660
        %667 = vmatpush.msra.mxu0 %v659
        %668 = vmatpush.msra.mxu0 %v658
        %669 = vmatpush.msra.mxu0 %v657
        %670 = vmatpush.msra.mxu0 %v656
        %671 = vmatpush.msra.mxu0 %v655
        %672 = vmatpush.msra.mxu0 %v654
        %673 = vmatpush.msra.mxu0 %v653
        %674 = vmatpush.msra.mxu0 %v652
        %675 = vmatpush.msra.mxu0 %v651
        %676 = vmatpush.msra.mxu0 %v650
        %677 = vmatpush.msra.mxu0 %v649
        %678 = vmatpush.msra.mxu0 %v648
        %679 = vmatpush.msra.mxu0 %v647
        %680 = vmatmul.f32.gmra.mxu0 %v646
        %v681 = vpop.f32.mrf.mxu0
        %v682 = vadd.f32 %v663, %v681
        %683 = vdwg.mxu0
        %v684 = vadd.f32 %v600, %v682
        %685 = vadd.xlane.f32.xlu0 %v684
        %v686 = vpop.xlane.xlu0 %685
        %v687 = vmul.f32 %v686, 0.03125
        %v688 = vsub.f32 %v684, %v687
        %v689 = vmul.f32 %v688, %v233
        %v690 = vmul.f32 %v689, %v689
        %691 = vadd.xlane.f32.xlu0 %v690
        %v692 = vpop.xlane.xlu0 %691
        %v693 = vmul.f32 %v692, 0.03125
        %v694 = vadd.f32 %v693, 1e-12
        %v695 = vrsqrt.pop %v694
        %v696 = vmul.f32 %v695, %v694
        %v697 = vmul.f32 %v696, %v695
        %v698 = vmul.f32 0.5, %v697
        %v699 = vsub.f32 1.5, %v698
        %v700 = vmul.f32 %v695, %v699
        %vm701 = vweird.f32 %v694
        %vm702 = vweird.f32 %v695
        %vm703 = vmor %vm701, %vm702
        %v704 = vsel %vm703, %v695, %v700
        %v705 = vmul.f32 %v689, %v704
        %v706 = vperm.slane %v249, 6
        %v707 = vmul.f32 %v705, %v706
        %v708 = vperm.slane %v249, 7
        %v709 = vadd.f32 %v707, %v708
        %s710 = scalar_lea.vmem [#allocation5], 384
        %v711 = vld [vmem:[%s710] sm:$0xff]
        %v712 = vld [vmem:[%s710 + $0x8] sm:$0xff]
        %v713 = vld [vmem:[%s710 + $0x10] sm:$0xff]
        %v714 = vld [vmem:[%s710 + $0x18] sm:$0xff]
        %v715 = vld [vmem:[%s710 + $0x20] sm:$0xff]
        %v716 = vld [vmem:[%s710 + $0x28] sm:$0xff]
        %v717 = vld [vmem:[%s710 + $0x30] sm:$0xff]
        %v718 = vld [vmem:[%s710 + $0x38] sm:$0xff]
        %v719 = vld [vmem:[%s710 + $0x40] sm:$0xff]
        %v720 = vld [vmem:[%s710 + $0x48] sm:$0xff]
        %v721 = vld [vmem:[%s710 + $0x50] sm:$0xff]
        %v722 = vld [vmem:[%s710 + $0x58] sm:$0xff]
        %v723 = vld [vmem:[%s710 + $0x60] sm:$0xff]
        %v724 = vld [vmem:[%s710 + $0x68] sm:$0xff]
        %v725 = vld [vmem:[%s710 + $0x70] sm:$0xff]
        %v726 = vld [vmem:[%s710 + $0x78] sm:$0xff]
        %v727 = vld [vmem:[%s710 + $0x80] sm:$0xff]
        %v728 = vld [vmem:[%s710 + $0x88] sm:$0xff]
        %v729 = vld [vmem:[%s710 + $0x90] sm:$0xff]
        %v730 = vld [vmem:[%s710 + $0x98] sm:$0xff]
        %v731 = vld [vmem:[%s710 + $0xa0] sm:$0xff]
        %v732 = vld [vmem:[%s710 + $0xa8] sm:$0xff]
        %v733 = vld [vmem:[%s710 + $0xb0] sm:$0xff]
        %v734 = vld [vmem:[%s710 + $0xb8] sm:$0xff]
        %v735 = vld [vmem:[%s710 + $0xc0] sm:$0xff]
        %v736 = vld [vmem:[%s710 + $0xc8] sm:$0xff]
        %v737 = vld [vmem:[%s710 + $0xd0] sm:$0xff]
        %v738 = vld [vmem:[%s710 + $0xd8] sm:$0xff]
        %v739 = vld [vmem:[%s710 + $0xe0] sm:$0xff]
        %v740 = vld [vmem:[%s710 + $0xe8] sm:$0xff]
        %v741 = vld [vmem:[%s710 + $0xf0] sm:$0xff]
        %v742 = vld [vmem:[%s710 + $0xf8] sm:$0xff]
        %v743 = vld [vmem:[%s710 + $0x100] sm:$0xff]
        %v744 = vld [vmem:[%s710 + $0x108] sm:$0xff]
        %v745 = vld [vmem:[%s710 + $0x110] sm:$0xff]
        %v746 = vld [vmem:[%s710 + $0x118] sm:$0xff]
        %v747 = vld [vmem:[%s710 + $0x120] sm:$0xff]
        %v748 = vld [vmem:[%s710 + $0x128] sm:$0xff]
        %v749 = vld [vmem:[%s710 + $0x130] sm:$0xff]
        %v750 = vld [vmem:[%s710 + $0x138] sm:$0xff]
        %v751 = vld [vmem:[%s710 + $0x140] sm:$0xff]
        %v752 = vld [vmem:[%s710 + $0x148] sm:$0xff]
        %v753 = vld [vmem:[%s710 + $0x150] sm:$0xff]
        %v754 = vld [vmem:[%s710 + $0x158] sm:$0xff]
        %v755 = vld [vmem:[%s710 + $0x160] sm:$0xff]
        %v756 = vld [vmem:[%s710 + $0x168] sm:$0xff]
        %v757 = vld [vmem:[%s710 + $0x170] sm:$0xff]
        %v758 = vld [vmem:[%s710 + $0x178] sm:$0xff]
        %759 = vmatpush.msra.mxu0 %v756
        %760 = vmatpush.msra.mxu0 %v753
        %761 = vmatpush.msra.mxu0 %v750
        %762 = vmatpush.msra.mxu0 %v747
        %763 = vmatpush.msra.mxu0 %v744
        %764 = vmatpush.msra.mxu0 %v741
        %765 = vmatpush.msra.mxu0 %v738
        %766 = vmatpush.msra.mxu0 %v735
        %767 = vmatpush.msra.mxu0 %v732
        %768 = vmatpush.msra.mxu0 %v729
        %769 = vmatpush.msra.mxu0 %v726
        %770 = vmatpush.msra.mxu0 %v723
        %771 = vmatpush.msra.mxu0 %v720
        %772 = vmatpush.msra.mxu0 %v717
        %773 = vmatpush.msra.mxu0 %v714
        %774 = vmatpush.msra.mxu0 %v711
        %775 = vmatmul.f32.gmra.mxu0 %v709
        %v776 = vpop.f32.mrf.mxu0
        %v777 = vadd.f32 0.0, %v776
        %778 = vdwg.mxu0
        %779 = vmatpush.msra.mxu0 %v757
        %780 = vmatpush.msra.mxu0 %v754
        %781 = vmatpush.msra.mxu0 %v751
        %782 = vmatpush.msra.mxu0 %v748
        %783 = vmatpush.msra.mxu0 %v745
        %784 = vmatpush.msra.mxu0 %v742
        %785 = vmatpush.msra.mxu0 %v739
        %786 = vmatpush.msra.mxu0 %v736
        %787 = vmatpush.msra.mxu0 %v733
        %788 = vmatpush.msra.mxu0 %v730
        %789 = vmatpush.msra.mxu0 %v727
        %790 = vmatpush.msra.mxu0 %v724
        %791 = vmatpush.msra.mxu0 %v721
        %792 = vmatpush.msra.mxu0 %v718
        %793 = vmatpush.msra.mxu0 %v715
        %794 = vmatpush.msra.mxu0 %v712
        %795 = vmatmul.f32.gmra.mxu0 %v709
        %v796 = vpop.f32.mrf.mxu0
        %v797 = vadd.f32 0.0, %v796
        %798 = vdwg.mxu0
        %799 = vmatpush.msra.mxu0 %v758
        %800 = vmatpush.msra.mxu0 %v755
        %801 = vmatpush.msra.mxu0 %v752
        %802 = vmatpush.msra.mxu0 %v749
        %803 = vmatpush.msra.mxu0 %v746
        %804 = vmatpush.msra.mxu0 %v743
        %805 = vmatpush.msra.mxu0 %v740
        %806 = vmatpush.msra.mxu0 %v737
        %807 = vmatpush.msra.mxu0 %v734
        %808 = vmatpush.msra.mxu0 %v731
        %809 = vmatpush.msra.mxu0 %v728
        %810 = vmatpush.msra.mxu0 %v725
        %811 = vmatpush.msra.mxu0 %v722
        %812 = vmatpush.msra.mxu0 %v719
        %813 = vmatpush.msra.mxu0 %v716
        %814 = vmatpush.msra.mxu0 %v713
        %815 = vmatmul.f32.gmra.mxu0 %v709
        %v816 = vpop.f32.mrf.mxu0
        %v817 = vadd.f32 0.0, %v816
        %818 = vdwg.mxu0
        %v819 = vperm.slane %v250, 0
        %v820 = vadd.f32 %v777, %v819
        %v821 = vperm.slane %v250, 1
        %v822 = vadd.f32 %v797, %v821
        %v823 = vperm.slane %v250, 2
        %v824 = vadd.f32 %v817, %v823
        %v825 = vmul.f32 %v822, %v238
        %v826 = vmul.f32 %v822, %v242
        %v827 = vmul.f32 %v824, %v238
        %v828 = vmul.f32 %v824, %v242
        %829 = vmatpush.xpose.msra.mxu0 0.0
        %830 = vmatpush.xpose.msra.mxu0 0.0
        %831 = vmatpush.xpose.msra.mxu0 0.0
        %832 = vmatpush.xpose.msra.mxu0 0.0
        %833 = vmatpush.xpose.msra.mxu0 0.0
        %834 = vmatpush.xpose.msra.mxu0 0.0
        %835 = vmatpush.xpose.msra.mxu0 0.0
        %836 = vmatpush.xpose.msra.mxu0 0.0
        %837 = vmatpush.xpose.msra.mxu0 0.0
        %838 = vmatpush.xpose.msra.mxu0 0.0
        %839 = vmatpush.xpose.msra.mxu0 0.0
        %840 = vmatpush.xpose.msra.mxu0 0.0
        %841 = vmatpush.xpose.msra.mxu0 0.0
        %842 = vmatpush.xpose.msra.mxu0 0.0
        %843 = vmatpush.xpose.msra.mxu0 %v826
        %844 = vmatpush.xpose.msra.mxu0 %v825
        %845 = vmatmul.f32.gmra.mxu0 %v820
        %v846 = vpop.f32.mrf.mxu0
        %v847 = vadd.f32 0.0, %v846
        %848 = vdwg.mxu0
        %v849 = vmul.f32 %v847, 0.25
        %v850 = vadd.f32 %v849, %v478
        %v851 = vsel %vm244, %v850, -1e+30
        %v852 = vsel %vm481, %v851, -inf
        %853 = vmax.xlane.f32.xlu0 %v852
        %v854 = vpop.xlane.xlu0 %853
        %v855 = vmul.f32 %v854, %v486
        %v856 = vadd.f32 %v855, 0.0
        %v857 = vsel %vm246, %v850, -1e+30
        %v858 = vsel %vm481, %v857, -inf
        %859 = vmax.xlane.f32.xlu0 %v858
        %v860 = vpop.xlane.xlu0 %859
        %v861 = vmul.f32 %v860, %v494
        %v862 = vadd.f32 %v856, %v861
        %v863 = vsub.f32 %v850, %v862
        %v864 = vmul.f32 %v863, 1.442695
        %v865 = vpow.pop %v864
        %v866 = vmul.f32 %v865, %v486
        %v867 = vsel %vm481, %v866, 0.0
        %868 = vadd.xlane.f32.xlu0 %v867
        %v869 = vpop.xlane.xlu0 %868
        %v870 = vrcp.pop %v869
        %v871 = vmul.f32 %v870, %v486
        %v872 = vadd.f32 %v871, 0.0
        %v873 = vmul.f32 %v865, %v494
        %v874 = vsel %vm481, %v873, 0.0
        %875 = vadd.xlane.f32.xlu0 %v874
        %v876 = vpop.xlane.xlu0 %875
        %v877 = vrcp.pop %v876
        %v878 = vmul.f32 %v877, %v494
        %v879 = vadd.f32 %v872, %v878
        %v880 = vmul.f32 %v865, %v879
        %v882 = vsel %vm481, %v880, 0
        %884 = vmatpush.msra.mxu0 0.0
        %885 = vmatpush.msra.mxu0 0.0
        %886 = vmatpush.msra.mxu0 0.0
        %887 = vmatpush.msra.mxu0 0.0
        %888 = vmatpush.msra.mxu0 0.0
        %889 = vmatpush.msra.mxu0 0.0
        %890 = vmatpush.msra.mxu0 0.0
        %891 = vmatpush.msra.mxu0 0.0
        %892 = vmatpush.msra.mxu0 0.0
        %893 = vmatpush.msra.mxu0 0.0
        %894 = vmatpush.msra.mxu0 0.0
        %895 = vmatpush.msra.mxu0 0.0
        %896 = vmatpush.msra.mxu0 0.0
        %897 = vmatpush.msra.mxu0 0.0
        %898 = vmatpush.msra.mxu0 %v828
        %899 = vmatpush.msra.mxu0 %v827
        %900 = vmatmul.f32.gmra.mxu0 %v882
        %v901 = vpop.f32.mrf.mxu0
        %v902 = vadd.f32 0.0, %v901
        %903 = vdwg.mxu0
        %v904 = vld [vmem:[#allocation2 + $0x300] sm:$0xff]
        %v905 = vld [vmem:[#allocation2 + $0x308] sm:$0xff]
        %v906 = vld [vmem:[#allocation2 + $0x310] sm:$0xff]
        %v907 = vld [vmem:[#allocation2 + $0x318] sm:$0xff]
        %v908 = vld [vmem:[#allocation2 + $0x320] sm:$0xff]
        %v909 = vld [vmem:[#allocation2 + $0x328] sm:$0xff]
        %v910 = vld [vmem:[#allocation2 + $0x330] sm:$0xff]
        %v911 = vld [vmem:[#allocation2 + $0x338] sm:$0xff]
        %v912 = vld [vmem:[#allocation2 + $0x340] sm:$0xff]
        %v913 = vld [vmem:[#allocation2 + $0x348] sm:$0xff]
        %v914 = vld [vmem:[#allocation2 + $0x350] sm:$0xff]
        %v915 = vld [vmem:[#allocation2 + $0x358] sm:$0xff]
        %v916 = vld [vmem:[#allocation2 + $0x360] sm:$0xff]
        %v917 = vld [vmem:[#allocation2 + $0x368] sm:$0xff]
        %v918 = vld [vmem:[#allocation2 + $0x370] sm:$0xff]
        %v919 = vld [vmem:[#allocation2 + $0x378] sm:$0xff]
        %v920 = vperm.slane %v250, 3
        %921 = vmatpush.msra.mxu0 %v919
        %922 = vmatpush.msra.mxu0 %v918
        %923 = vmatpush.msra.mxu0 %v917
        %924 = vmatpush.msra.mxu0 %v916
        %925 = vmatpush.msra.mxu0 %v915
        %926 = vmatpush.msra.mxu0 %v914
        %927 = vmatpush.msra.mxu0 %v913
        %928 = vmatpush.msra.mxu0 %v912
        %929 = vmatpush.msra.mxu0 %v911
        %930 = vmatpush.msra.mxu0 %v910
        %931 = vmatpush.msra.mxu0 %v909
        %932 = vmatpush.msra.mxu0 %v908
        %933 = vmatpush.msra.mxu0 %v907
        %934 = vmatpush.msra.mxu0 %v906
        %935 = vmatpush.msra.mxu0 %v905
        %936 = vmatpush.msra.mxu0 %v904
        %937 = vmatmul.f32.gmra.mxu0 %v902
        %v938 = vpop.f32.mrf.mxu0
        %v939 = vadd.f32 %v920, %v938
        %940 = vdwg.mxu0
        %v941 = vadd.f32 %v709, %v939
        %942 = vadd.xlane.f32.xlu0 %v941
        %v943 = vpop.xlane.xlu0 %942
        %v944 = vmul.f32 %v943, 0.03125
        %v945 = vsub.f32 %v941, %v944
        %v946 = vmul.f32 %v945, %v233
        %v947 = vmul.f32 %v946, %v946
        %948 = vadd.xlane.f32.xlu0 %v947
        %v949 = vpop.xlane.xlu0 %948
        %v950 = vmul.f32 %v949, 0.03125
        %v951 = vadd.f32 %v950, 1e-12
        %v952 = vrsqrt.pop %v951
        %v953 = vmul.f32 %v952, %v951
        %v954 = vmul.f32 %v953, %v952
        %v955 = vmul.f32 0.5, %v954
        %v956 = vsub.f32 1.5, %v955
        %v957 = vmul.f32 %v952, %v956
        %vm958 = vweird.f32 %v951
        %vm959 = vweird.f32 %v952
        %vm960 = vmor %vm958, %vm959
        %v961 = vsel %vm960, %v952, %v957
        %v962 = vmul.f32 %v946, %v961
        %v963 = vperm.slane %v250, 4
        %v964 = vmul.f32 %v962, %v963
        %v965 = vperm.slane %v250, 5
        %v966 = vadd.f32 %v964, %v965
        %v967 = vld [vmem:[#allocation2 + $0x380] sm:$0xff]
        %v968 = vld [vmem:[#allocation2 + $0x388] sm:$0xff]
        %v969 = vld [vmem:[#allocation2 + $0x390] sm:$0xff]
        %v970 = vld [vmem:[#allocation2 + $0x398] sm:$0xff]
        %v971 = vld [vmem:[#allocation2 + $0x3a0] sm:$0xff]
        %v972 = vld [vmem:[#allocation2 + $0x3a8] sm:$0xff]
        %v973 = vld [vmem:[#allocation2 + $0x3b0] sm:$0xff]
        %v974 = vld [vmem:[#allocation2 + $0x3b8] sm:$0xff]
        %v975 = vld [vmem:[#allocation2 + $0x3c0] sm:$0xff]
        %v976 = vld [vmem:[#allocation2 + $0x3c8] sm:$0xff]
        %v977 = vld [vmem:[#allocation2 + $0x3d0] sm:$0xff]
        %v978 = vld [vmem:[#allocation2 + $0x3d8] sm:$0xff]
        %v979 = vld [vmem:[#allocation2 + $0x3e0] sm:$0xff]
        %v980 = vld [vmem:[#allocation2 + $0x3e8] sm:$0xff]
        %v981 = vld [vmem:[#allocation2 + $0x3f0] sm:$0xff]
        %v982 = vld [vmem:[#allocation2 + $0x3f8] sm:$0xff]
        %v983 = vperm.slane %v250, 6
        %984 = vmatpush.msra.mxu0 %v982
        %985 = vmatpush.msra.mxu0 %v981
        %986 = vmatpush.msra.mxu0 %v980
        %987 = vmatpush.msra.mxu0 %v979
        %988 = vmatpush.msra.mxu0 %v978
        %989 = vmatpush.msra.mxu0 %v977
        %990 = vmatpush.msra.mxu0 %v976
        %991 = vmatpush.msra.mxu0 %v975
        %992 = vmatpush.msra.mxu0 %v974
        %993 = vmatpush.msra.mxu0 %v973
        %994 = vmatpush.msra.mxu0 %v972
        %995 = vmatpush.msra.mxu0 %v971
        %996 = vmatpush.msra.mxu0 %v970
        %997 = vmatpush.msra.mxu0 %v969
        %998 = vmatpush.msra.mxu0 %v968
        %999 = vmatpush.msra.mxu0 %v967
        %1000 = vmatmul.f32.gmra.mxu0 %v966
        %v1001 = vpop.f32.mrf.mxu0
        %v1002 = vadd.f32 %v983, %v1001
        %1003 = vdwg.mxu0
        %v1004 = vmul.f32 %v1002, %v1002
        %v1005 = vmul.f32 %v1002, %v1004
        %v1006 = vmul.f32 %v1005, 0.044715
        %v1007 = vadd.f32 %v1002, %v1006
        %v1008 = vmul.f32 %v1007, 0.7978846
        %v1009 = vtanh.pop %v1008
        %v1010 = vadd.f32 %v1009, 1.0
        %v1011 = vmul.f32 %v1010, 0.5
        %v1012 = vmul.f32 %v1002, %v1011
        %v1013 = vld [vmem:[#allocation2 + $0x400] sm:$0xff]
        %v1014 = vld [vmem:[#allocation2 + $0x408] sm:$0xff]
        %v1015 = vld [vmem:[#allocation2 + $0x410] sm:$0xff]
        %v1016 = vld [vmem:[#allocation2 + $0x418] sm:$0xff]
        %v1017 = vld [vmem:[#allocation2 + $0x420] sm:$0xff]
        %v1018 = vld [vmem:[#allocation2 + $0x428] sm:$0xff]
        %v1019 = vld [vmem:[#allocation2 + $0x430] sm:$0xff]
        %v1020 = vld [vmem:[#allocation2 + $0x438] sm:$0xff]
        %v1021 = vld [vmem:[#allocation2 + $0x440] sm:$0xff]
        %v1022 = vld [vmem:[#allocation2 + $0x448] sm:$0xff]
        %v1023 = vld [vmem:[#allocation2 + $0x450] sm:$0xff]
        %v1024 = vld [vmem:[#allocation2 + $0x458] sm:$0xff]
        %v1025 = vld [vmem:[#allocation2 + $0x460] sm:$0xff]
        %v1026 = vld [vmem:[#allocation2 + $0x468] sm:$0xff]
        %v1027 = vld [vmem:[#allocation2 + $0x470] sm:$0xff]
        %v1028 = vld [vmem:[#allocation2 + $0x478] sm:$0xff]
        %v1029 = vperm.slane %v250, 7
        %1030 = vmatpush.msra.mxu0 %v1028
        %1031 = vmatpush.msra.mxu0 %v1027
        %1032 = vmatpush.msra.mxu0 %v1026
        %1033 = vmatpush.msra.mxu0 %v1025
        %1034 = vmatpush.msra.mxu0 %v1024
        %1035 = vmatpush.msra.mxu0 %v1023
        %1036 = vmatpush.msra.mxu0 %v1022
        %1037 = vmatpush.msra.mxu0 %v1021
        %1038 = vmatpush.msra.mxu0 %v1020
        %1039 = vmatpush.msra.mxu0 %v1019
        %1040 = vmatpush.msra.mxu0 %v1018
        %1041 = vmatpush.msra.mxu0 %v1017
        %1042 = vmatpush.msra.mxu0 %v1016
        %1043 = vmatpush.msra.mxu0 %v1015
        %1044 = vmatpush.msra.mxu0 %v1014
        %1045 = vmatpush.msra.mxu0 %v1013
        %1046 = vmatmul.f32.gmra.mxu0 %v1012
        %v1047 = vpop.f32.mrf.mxu0
        %v1048 = vadd.f32 %v1029, %v1047
        %1049 = vdwg.mxu0
        %v1050 = vadd.f32 %v966, %v1048
        %1051 = vadd.xlane.f32.xlu0 %v1050
        %v1052 = vpop.xlane.xlu0 %1051
        %v1053 = vmul.f32 %v1052, 0.03125
        %v1054 = vsub.f32 %v1050, %v1053
        %v1055 = vmul.f32 %v1054, %v233
        %v1056 = vmul.f32 %v1055, %v1055
        %1057 = vadd.xlane.f32.xlu0 %v1056
        %v1058 = vpop.xlane.xlu0 %1057
        %v1059 = vmul.f32 %v1058, 0.03125
        %v1060 = vadd.f32 %v1059, 1e-12
        %v1061 = vrsqrt.pop %v1060
        %v1062 = vmul.f32 %v1061, %v1060
        %v1063 = vmul.f32 %v1062, %v1061
        %v1064 = vmul.f32 0.5, %v1063
        %v1065 = vsub.f32 1.5, %v1064
        %v1066 = vmul.f32 %v1061, %v1065
        %vm1067 = vweird.f32 %v1060
        %vm1068 = vweird.f32 %v1061
        %vm1069 = vmor %vm1067, %vm1068
        %v1070 = vsel %vm1069, %v1061, %v1066
        %v1071 = vmul.f32 %v1055, %v1070
        %v1072 = vperm.slane %v251, 0
        %v1073 = vmul.f32 %v1071, %v1072
        %v1074 = vperm.slane %v251, 1
        %v1075 = vadd.f32 %v1073, %v1074
        %v1076 = vld [vmem:[#allocation2 + $0x80] sm:$0xff]
        %v1077 = vld [vmem:[#allocation2 + $0x88] sm:$0xff]
        %v1078 = vld [vmem:[#allocation2 + $0x90] sm:$0xff]
        %v1079 = vld [vmem:[#allocation2 + $0x98] sm:$0xff]
        %v1080 = vld [vmem:[#allocation2 + $0xa0] sm:$0xff]
        %v1081 = vld [vmem:[#allocation2 + $0xa8] sm:$0xff]
        %v1082 = vld [vmem:[#allocation2 + $0xb0] sm:$0xff]
        %v1083 = vld [vmem:[#allocation2 + $0xb8] sm:$0xff]
        %v1084 = vld [vmem:[#allocation2 + $0xc0] sm:$0xff]
        %v1085 = vld [vmem:[#allocation2 + $0xc8] sm:$0xff]
        %v1086 = vld [vmem:[#allocation2 + $0xd0] sm:$0xff]
        %v1087 = vld [vmem:[#allocation2 + $0xd8] sm:$0xff]
        %v1088 = vld [vmem:[#allocation2 + $0xe0] sm:$0xff]
        %v1089 = vld [vmem:[#allocation2 + $0xe8] sm:$0xff]
        %v1090 = vld [vmem:[#allocation2 + $0xf0] sm:$0xff]
        %v1091 = vld [vmem:[#allocation2 + $0xf8] sm:$0xff]
        %v1093 = vrot.slane %v248, 4
        %1095 = vmatpush.msra.mxu0 %v1091
        %1096 = vmatpush.msra.mxu0 %v1090
        %1097 = vmatpush.msra.mxu0 %v1089
        %1098 = vmatpush.msra.mxu0 %v1088
        %1099 = vmatpush.msra.mxu0 %v1087
        %1100 = vmatpush.msra.mxu0 %v1086
        %1101 = vmatpush.msra.mxu0 %v1085
        %1102 = vmatpush.msra.mxu0 %v1084
        %1103 = vmatpush.msra.mxu0 %v1083
        %1104 = vmatpush.msra.mxu0 %v1082
        %1105 = vmatpush.msra.mxu0 %v1081
        %1106 = vmatpush.msra.mxu0 %v1080
        %1107 = vmatpush.msra.mxu0 %v1079
        %1108 = vmatpush.msra.mxu0 %v1078
        %1109 = vmatpush.msra.mxu0 %v1077
        %1110 = vmatpush.msra.mxu0 %v1076
        %1111 = vmatmul.f32.gmra.mxu0 %v1075
        %v1112 = vpop.f32.mrf.mxu0
        %v1113 = vadd.f32 %v1093, %v1112
        %1114 = vdwg.mxu0
        %v1115 = vtanh.pop %v1113
        %v1116 = vld [vmem:[#allocation2 + $0x100] sm:$0xff]
        %v1117 = vld [vmem:[#allocation2 + $0x108] sm:$0xff]
        %v1118 = vld [vmem:[#allocation2 + $0x110] sm:$0xff]
        %v1119 = vld [vmem:[#allocation2 + $0x118] sm:$0xff]
        %v1120 = vld [vmem:[#allocation2 + $0x120] sm:$0xff]
        %v1121 = vld [vmem:[#allocation2 + $0x128] sm:$0xff]
        %v1122 = vld [vmem:[#allocation2 + $0x130] sm:$0xff]
        %v1123 = vld [vmem:[#allocation2 + $0x138] sm:$0xff]
        %v1124 = vld [vmem:[#allocation2 + $0x140] sm:$0xff]
        %v1125 = vld [vmem:[#allocation2 + $0x148] sm:$0xff]
        %v1126 = vld [vmem:[#allocation2 + $0x150] sm:$0xff]
        %v1127 = vld [vmem:[#allocation2 + $0x158] sm:$0xff]
        %v1128 = vld [vmem:[#allocation2 + $0x160] sm:$0xff]
        %v1129 = vld [vmem:[#allocation2 + $0x168] sm:$0xff]
        %v1130 = vld [vmem:[#allocation2 + $0x170] sm:$0xff]
        %v1131 = vld [vmem:[#allocation2 + $0x178] sm:$0xff]
        %v1132 = vrot.slane %v248, 5
        %1134 = vmatpush.msra.mxu0 %v1131
        %1135 = vmatpush.msra.mxu0 %v1130
        %1136 = vmatpush.msra.mxu0 %v1129
        %1137 = vmatpush.msra.mxu0 %v1128
        %1138 = vmatpush.msra.mxu0 %v1127
        %1139 = vmatpush.msra.mxu0 %v1126
        %1140 = vmatpush.msra.mxu0 %v1125
        %1141 = vmatpush.msra.mxu0 %v1124
        %1142 = vmatpush.msra.mxu0 %v1123
        %1143 = vmatpush.msra.mxu0 %v1122
        %1144 = vmatpush.msra.mxu0 %v1121
        %1145 = vmatpush.msra.mxu0 %v1120
        %1146 = vmatpush.msra.mxu0 %v1119
        %1147 = vmatpush.msra.mxu0 %v1118
        %1148 = vmatpush.msra.mxu0 %v1117
        %1149 = vmatpush.msra.mxu0 %v1116
        %1150 = vmatmul.f32.gmra.mxu0 %v1115
        %v1151 = vpop.f32.mrf.mxu0
        %v1152 = vadd.f32 %v1132, %v1151
        %1153 = vdwg.mxu0
        %1154 = vst [vmem:[%s223] sm:$0x1] %v1152
        %s1155 = sand.u32 %s117, 1
        %s1156 = scalar_lea.sflag [#allocation4], %s1155
        %s1157 = sand.u32 %s117, 1
        %s1158 = scalar_lea.vmem [#allocation7], %s1157
        // Predicated region
        $region45: #{bert_idiomifier_forward.1} parent=35 // pred_check
          %p1159 = pneg %p127
        $region46: #{bert_idiomifier_forward.1} parent=35 // pred_check_branch
          %1161 = sbr.rel (%p1159) target = $region48
        $region47: #{bert_idiomifier_forward.1} parent=35 // pred_region
          %1163 = vsyncadd %s1156, 0
          %s1164 = scalar_lea.hbm %s4, %s20
          %s1166 = sshll.u32 %s1158, 4
          %s1167 = int_to_ptr.vmem [resolvable:$true] %s1166
          %s1168 = sshll.u32 %s1164, 4
          %s1169 = int_to_ptr.hbm [resolvable:$true] %s1168
          %1171 = dma.vmem_to_hbm [thread:$0]  %s1167, 16, %s1169, %s1156
        $region48: #{bert_idiomifier_forward.1} parent=35 // pred_fallthru
          _
      $region36: #{bert_idiomifier_forward.1} parent=5 // pred_fallthru
        _
      %p1172 = scmp.le.s32.totalorder 2, %s15
      // Predicated region
      $region49: #{bert_idiomifier_forward.1} parent=5 // pred_check
        %p1173 = pneg %p1172
      $region50: #{bert_idiomifier_forward.1} parent=5 // pred_check_branch
        %1175 = sbr.rel (%p1173) target = $region52
      $region51: #{bert_idiomifier_forward.1} parent=5 // pred_region
        %s1176 = ssub.s32 %s15, 2
        // Predicated region
        $region53: #{bert_idiomifier_forward.1} parent=51 // pred_check
          %p1177 = pneg %p133
        $region54: #{bert_idiomifier_forward.1} parent=51 // pred_check_branch
          %1179 = sbr.rel (%p1177) target = $region56
        $region55: #{bert_idiomifier_forward.1} parent=51 // pred_region
          %s1180 = sand.u32 %s118, 1
          %s1181 = scalar_lea.sflag [#allocation4], %s1180
          %s1182 = sand.u32 %s118, 1
          %s1183 = scalar_lea.vmem [#allocation7], %s1182
          %1185 = dma.done %s1181, 16
        $region56: #{bert_idiomifier_forward.1} parent=51 // pred_fallthru
          _
      $region52: #{bert_idiomifier_forward.1} parent=5 // pred_fallthru
        _
    $region6: #{bert_idiomifier_forward.1} parent=1 // loop_footer
      %s19 = sadd.s32 1, %s15
    $region7: #{bert_idiomifier_forward.1} parent=1 // loop_footer_branch
      %14 = sbr.rel target = $region3
    $region8: #{bert_idiomifier_forward.1} parent=1 // loop_exit
      _
    %1186 = vsyncpa [#allocation3], 1
    %s1187 = scalar_lea.sflag [#allocation3], 1
    %1188 = vsyncpa %s1187, 1
    %1189 = vsyncpa [#allocation6], 1
    %1190 = vsyncpa [#allocation4], 1
    %s1191 = scalar_lea.sflag [#allocation4], 1
    %1192 = vsyncpa %s1191, 1

</llo_original>
